<compile_context>
chip_gen: v6e
topology: v6e:2x2x1
jax: 0.10.0
libtpu: 0.0.40
codegen_flags: <defaults>
</compile_context>

<pallas_src>
import functools

import jax
import jax.numpy as jnp
from jax.experimental import pallas as pl
from jax.experimental.pallas import tpu as pltpu

P = 128            # padded feature width (sublane axis); real hidden width = 50
N_LAYERS = 8       # 3 trunk + 5 branch linear layers
N_IN = 2           # real input features
N_OUT = 3          # real output features
LANE = 128         # lane width: sample tiles are multiples of this
MAX_TILE_M = 1024  # max samples per grid step


def _swish(h):
    # x * sigmoid(x) with exp and the (approx) reciprocal on the EUP slot.
    return h * pl.reciprocal(1.0 + jnp.exp(-h), approx=True)


def af_kernel(x_ref, w0t_ref, wt_ref, bt_ref, o_ref):
    """One lane-dense column tile (tile_m samples) of the 8-layer MLP.

    x_ref  : (2, tile_m)   f32   input samples, transposed (lane-dense)
    w0t_ref: (P, 2)        f32   W0^T, zero-padded to 128 rows
    wt_ref : (7, P, P)     bf16  W_i^T (layers 1..7), zero-padded
    bt_ref : (P, 8)        f32   biases, one column per layer
    o_ref  : (3, tile_m)   f32   output samples, transposed (lane-dense)
    """
    x = x_ref[...]            # (2, tile_m)
    w0t = w0t_ref[...]        # (P, 2)
    bt = bt_ref[...]          # (P, 8)

    # Layer 0 (2 -> 50) as two rank-1 broadcast MACs on the VPU: the x rows
    # are cheap sublane-stride-0 broadcasts, and no K=2 MXU pass or padded
    # input slab is needed.
    h = w0t[:, 0:1] * x[0:1, :] + w0t[:, 1:2] * x[1:2, :] + bt[:, 0:1]
    h = _swish(h)

    # Layers 1..7: bf16 MXU matmuls with f32 accumulation.  Zero-padded
    # weight rows/cols + zero biases keep padded sublanes exactly 0
    # (swish(0) = 0), so padding never leaks into the real outputs.
    for i in range(N_LAYERS - 1):
        h = jnp.dot(wt_ref[i], h.astype(jnp.bfloat16),
                    preferred_element_type=jnp.float32) + bt[:, i + 1:i + 2]
        if i < N_LAYERS - 2:        # no activation after the final 50->3 layer
            h = _swish(h)

    o_ref[...] = h[:N_OUT, :].astype(o_ref.dtype)


def init_params(seed=42):
    """Deterministic PyTorch-Linear-style init: U(-1/sqrt(fan_in), +1/sqrt(fan_in))."""
    key = jax.random.PRNGKey(seed)

    def linear(k, fan_in, fan_out):
        kw, kb = jax.random.split(k)
        bound = 1.0 / jnp.sqrt(jnp.float32(fan_in))
        w = jax.random.uniform(kw, (fan_in, fan_out), jnp.float32, -bound, bound)
        b = jax.random.uniform(kb, (fan_out,), jnp.float32, -bound, bound)
        return w, b

    trunk_dims = [(2, 50), (50, 50), (50, 50)]        # self.net
    branch_dims = [(50, 50)] * 4 + [(50, 3)]          # net1 / net2 / net3

    keys = jax.random.split(key, len(trunk_dims) + 3 * len(branch_dims))
    ki = 0
    trunk = []
    for fi, fo in trunk_dims:
        trunk.append(linear(keys[ki], fi, fo)); ki += 1
    branches = {}
    for area in (1, 2, 3):
        layers = []
        for fi, fo in branch_dims:
            layers.append(linear(keys[ki], fi, fo)); ki += 1
        branches[area] = layers
    return trunk, branches


def pack_params(trunk, branch):
    """Pad + stack the 8 (w, b) pairs into the kernel's 3 transposed arrays."""
    layers = list(trunk) + list(branch)               # 8 x (w[in,out], b[out])
    w0, b0 = layers[0]                                # (2, 50), (50,)
    w0t = jnp.zeros((P, N_IN), jnp.float32).at[:w0.shape[1], :].set(w0.T)
    wt_stack = jnp.zeros((N_LAYERS - 1, P, P), jnp.float32)
    bt_stack = jnp.zeros((P, N_LAYERS), jnp.float32)
    bt_stack = bt_stack.at[:b0.shape[0], 0].set(b0)
    for i in range(1, N_LAYERS):
        w, bvec = layers[i]                           # (fi, fo)
        fi, fo = w.shape
        wt_stack = wt_stack.at[i - 1, :fo, :fi].set(w.T)
        bt_stack = bt_stack.at[:fo, i].set(bvec)
    return w0t, wt_stack.astype(jnp.bfloat16), bt_stack


@functools.partial(jax.jit, static_argnames=("rows_padded", "tile_m"))
def _run_kernel(x_t, w0t, wt_stack, bt_stack, rows_padded, tile_m):
    grid = (rows_padded // tile_m,)
    flops = rows_padded * (2 * N_IN * P + 2 * (N_LAYERS - 1) * P * P)
    transcendentals = rows_padded * P * (N_LAYERS - 1)
    bytes_accessed = (N_IN * rows_padded * 4 + N_OUT * rows_padded * 4
                      + (N_LAYERS - 1) * P * P * 2      # bf16 weight stack
                      + P * N_IN * 4 + P * N_LAYERS * 4)
    return pl.pallas_call(
        af_kernel,
        out_shape=jax.ShapeDtypeStruct((N_OUT, rows_padded), jnp.float32),
        grid=grid,
        in_specs=[
            pl.BlockSpec((N_IN, tile_m), lambda i: (0, i)),           # x: streamed, lane-dense
            pl.BlockSpec((P, N_IN), lambda i: (0, 0)),                # w0^T: resident
            pl.BlockSpec((N_LAYERS - 1, P, P), lambda i: (0, 0, 0)),  # W^T stack: resident
            pl.BlockSpec((P, N_LAYERS), lambda i: (0, 0)),            # biases: resident
        ],
        out_specs=pl.BlockSpec((N_OUT, tile_m), lambda i: (0, i)),    # out: lane-dense
        compiler_params=pltpu.CompilerParams(
            # On v7x, pltpu.CORE_PARALLEL here (with grid >= 2) splits the
            # row grid across both TensorCores; "parallel" is the portable
            # default for v5e/v6e single-core chips.
            dimension_semantics=("parallel",)),
        cost_estimate=pl.CostEstimate(flops=flops,
                                      transcendentals=transcendentals,
                                      bytes_accessed=bytes_accessed),
    )(x_t, w0t, wt_stack, bt_stack)


def _bucket_rows(n):
    """Round batch size up to a small set of static shapes (amortize compiles)."""
    r = max(LANE, -(-n // LANE) * LANE)          # multiple of 128, >= 128
    if r <= 512:
        p = LANE
        while p < r:
            p *= 2
        return p                                  # 128 / 256 / 512
    return -(-r // 512) * 512                     # multiples of 512


def _choose_tile_m(rows_padded):
    """Largest lane-aligned tile that divides rows_padded, with >= 2 grid
    steps once the batch is big enough to feed both v7x TensorCores."""
    if rows_padded <= 256:
        return rows_padded                        # single tile; latency-bound
    if rows_padded >= 2048 and rows_padded % MAX_TILE_M == 0:
        return MAX_TILE_M
    return min(512, rows_padded // 2)


def af_module_forward(x, area, packed_params):
    """x: [N, 2] float32, area in {1, 2, 3} (Python int).  Returns [N, 3]."""
    if area not in (1, 2, 3):
        raise ValueError("area must be 1, 2 or 3")
    x = jnp.asarray(x, jnp.float32)
    n = x.shape[0]
    rows_padded = _bucket_rows(n)
    tile_m = _choose_tile_m(rows_padded)
    # Transposed, zero-padded input: [2, rows_padded] (lane-dense stream).
    x_t = jnp.zeros((N_IN, rows_padded), jnp.float32).at[:, :n].set(x.T)
    w0t, wt_stack, bt_stack = packed_params[area]
    out_t = _run_kernel(x_t, w0t, wt_stack, bt_stack, rows_padded, tile_m)
    return out_t[:, :n].T                         # back to [N, 3]


def _reference_forward(x, area, trunk, branches):
    """Pure-JAX f32 reference matching the original PyTorch module."""
    layers = list(trunk) + list(branches[area])
    h = x
    for i, (w, b) in enumerate(layers):
        h = h @ w + b
        if i < len(layers) - 1:
            h = h * jax.nn.sigmoid(h)
    return h


if __name__ == "__main__":
    trunk, branches = init_params(seed=42)
    packed = {a: pack_params(trunk, branches[a]) for a in (1, 2, 3)}

    key = jax.random.PRNGKey(0)
    k_small, k_big = jax.random.split(key)

    # Small batch (single tile).
    x = jax.random.normal(k_small, (8, 2), jnp.float32)          # batch=8, in=2
    out = jax.block_until_ready(af_module_forward(x, 2, packed))
    assert out.shape == (8, 3)
    ref = _reference_forward(x, 2, trunk, branches)
    # bf16 weights/activations inside the kernel -> loosened tolerance.
    assert jnp.allclose(out, ref, atol=3e-2, rtol=3e-2), \
        float(jnp.max(jnp.abs(out - ref)))

    # Multi-tile path (grid > 1) on a larger, non-aligned batch.
    x_big = jax.random.normal(k_big, (600, 2), jnp.float32)
    out_big = jax.block_until_ready(af_module_forward(x_big, 1, packed))
    assert out_big.shape == (600, 3)
    ref_big = _reference_forward(x_big, 1, trunk, branches)
    assert jnp.allclose(out_big, ref_big, atol=3e-2, rtol=3e-2), \
        float(jnp.max(jnp.abs(out_big - ref_big)))

    print("KERNEL_OK")
</pallas_src>

<mosaic_0001>
module attributes {stable_mosaic.version = 11 : i64} {
  func.func @af_kernel(%arg0: i32, %arg1: memref<2x128xf32, #tpu.memory_space<vmem>>, %arg2: memref<128x2xf32, #tpu.memory_space<vmem>>, %arg3: memref<7x128x128xbf16, #tpu.memory_space<vmem>>, %arg4: memref<128x8xf32, #tpu.memory_space<vmem>>, %arg5: memref<3x128xf32, #tpu.memory_space<vmem>>) attributes {dimension_semantics = [#tpu.dimension_semantics<parallel>], iteration_bounds = array<i64: 1>, scalar_prefetch = 0 : i64, scratch_operands = 0 : i64, tpu.core_type = #tpu.core_type<tc>, window_params = [{transform_indices = @transform_0, window_bounds = array<i64: 2, 128>}, {pipeline_mode = #tpu.pipeline_mode<synchronous>, transform_indices = @transform_1, window_bounds = array<i64: 128, 2>}, {pipeline_mode = #tpu.pipeline_mode<synchronous>, transform_indices = @transform_2, window_bounds = array<i64: 7, 128, 128>}, {pipeline_mode = #tpu.pipeline_mode<synchronous>, transform_indices = @transform_3, window_bounds = array<i64: 128, 8>}, {transform_indices = @transform_4, window_bounds = array<i64: 3, 128>}]} {
    %c0 = arith.constant 0 : index
    %c0_0 = arith.constant 0 : index
    %0 = vector.load %arg1[%c0, %c0_0] : memref<2x128xf32, #tpu.memory_space<vmem>>, vector<2x128xf32>
    %c0_1 = arith.constant 0 : index
    %c0_2 = arith.constant 0 : index
    %1 = vector.load %arg2[%c0_1, %c0_2] : memref<128x2xf32, #tpu.memory_space<vmem>>, vector<128x2xf32>
    %c0_3 = arith.constant 0 : index
    %c0_4 = arith.constant 0 : index
    %2 = vector.load %arg4[%c0_3, %c0_4] : memref<128x8xf32, #tpu.memory_space<vmem>>, vector<128x8xf32>
    %3 = vector.extract_strided_slice %1 {offsets = [0, 0], sizes = [128, 1], strides = [1, 1]} : vector<128x2xf32> to vector<128x1xf32>
    %4 = vector.extract_strided_slice %0 {offsets = [0, 0], sizes = [1, 128], strides = [1, 1]} : vector<2x128xf32> to vector<1x128xf32>
    %5 = vector.broadcast %3 : vector<128x1xf32> to vector<128x128xf32>
    %6 = vector.broadcast %4 : vector<1x128xf32> to vector<128x128xf32>
    %7 = arith.mulf %5, %6 : vector<128x128xf32>
    %8 = vector.extract_strided_slice %1 {offsets = [0, 1], sizes = [128, 1], strides = [1, 1]} : vector<128x2xf32> to vector<128x1xf32>
    %9 = vector.extract_strided_slice %0 {offsets = [1, 0], sizes = [1, 128], strides = [1, 1]} : vector<2x128xf32> to vector<1x128xf32>
    %10 = vector.broadcast %8 : vector<128x1xf32> to vector<128x128xf32>
    %11 = vector.broadcast %9 : vector<1x128xf32> to vector<128x128xf32>
    %12 = arith.mulf %10, %11 : vector<128x128xf32>
    %13 = arith.addf %7, %12 : vector<128x128xf32>
    %14 = vector.extract_strided_slice %2 {offsets = [0, 0], sizes = [128, 1], strides = [1, 1]} : vector<128x8xf32> to vector<128x1xf32>
    %15 = vector.broadcast %14 : vector<128x1xf32> to vector<128x128xf32>
    %16 = arith.addf %13, %15 : vector<128x128xf32>
    %cst = arith.constant 0.000000e+00 : f32
    %17 = vector.broadcast %cst : f32 to vector<128x128xf32>
    %18 = arith.subf %17, %16 : vector<128x128xf32>
    %19 = math.exp %18 : vector<128x128xf32>
    %cst_5 = arith.constant 1.000000e+00 : f32
    %20 = vector.broadcast %cst_5 : f32 to vector<128x128xf32>
    %21 = arith.addf %20, %19 : vector<128x128xf32>
    %22 = tpu.reciprocal %21 {approx = true} : vector<128x128xf32> -> vector<128x128xf32>
    %23 = arith.mulf %16, %22 : vector<128x128xf32>
    %c0_6 = arith.constant 0 : index
    %c0_7 = arith.constant 0 : index
    %c0_8 = arith.constant 0 : index
    %24 = vector.load %arg3[%c0_6, %c0_7, %c0_8] : memref<7x128x128xbf16, #tpu.memory_space<vmem>>, vector<1x128x128xbf16>
    %25 = vector.shape_cast %24 : vector<1x128x128xbf16> to vector<128x128xbf16>
    %26 = arith.truncf %23 : vector<128x128xf32> to vector<128x128xbf16>
    %cst_9 = arith.constant dense<0.000000e+00> : vector<128x128xf32>
    %27 = tpu.matmul %25, %26, %cst_9 {dimension_numbers = #tpu.dot_dimension_numbers<[1], [0], [0], [1], [0, 0, 1, 1], [], []>} : vector<128x128xbf16>, vector<128x128xbf16>, vector<128x128xf32> -> vector<128x128xf32>
    %28 = vector.extract_strided_slice %2 {offsets = [0, 1], sizes = [128, 1], strides = [1, 1]} : vector<128x8xf32> to vector<128x1xf32>
    %29 = vector.broadcast %28 : vector<128x1xf32> to vector<128x128xf32>
    %30 = arith.addf %27, %29 : vector<128x128xf32>
    %cst_10 = arith.constant 0.000000e+00 : f32
    %31 = vector.broadcast %cst_10 : f32 to vector<128x128xf32>
    %32 = arith.subf %31, %30 : vector<128x128xf32>
    %33 = math.exp %32 : vector<128x128xf32>
    %cst_11 = arith.constant 1.000000e+00 : f32
    %34 = vector.broadcast %cst_11 : f32 to vector<128x128xf32>
    %35 = arith.addf %34, %33 : vector<128x128xf32>
    %36 = tpu.reciprocal %35 {approx = true} : vector<128x128xf32> -> vector<128x128xf32>
    %37 = arith.mulf %30, %36 : vector<128x128xf32>
    %c1 = arith.constant 1 : index
    %c0_12 = arith.constant 0 : index
    %c0_13 = arith.constant 0 : index
    %38 = vector.load %arg3[%c1, %c0_12, %c0_13] : memref<7x128x128xbf16, #tpu.memory_space<vmem>>, vector<1x128x128xbf16>
    %39 = vector.shape_cast %38 : vector<1x128x128xbf16> to vector<128x128xbf16>
    %40 = arith.truncf %37 : vector<128x128xf32> to vector<128x128xbf16>
    %cst_14 = arith.constant dense<0.000000e+00> : vector<128x128xf32>
    %41 = tpu.matmul %39, %40, %cst_14 {dimension_numbers = #tpu.dot_dimension_numbers<[1], [0], [0], [1], [0, 0, 1, 1], [], []>} : vector<128x128xbf16>, vector<128x128xbf16>, vector<128x128xf32> -> vector<128x128xf32>
    %42 = vector.extract_strided_slice %2 {offsets = [0, 2], sizes = [128, 1], strides = [1, 1]} : vector<128x8xf32> to vector<128x1xf32>
    %43 = vector.broadcast %42 : vector<128x1xf32> to vector<128x128xf32>
    %44 = arith.addf %41, %43 : vector<128x128xf32>
    %cst_15 = arith.constant 0.000000e+00 : f32
    %45 = vector.broadcast %cst_15 : f32 to vector<128x128xf32>
    %46 = arith.subf %45, %44 : vector<128x128xf32>
    %47 = math.exp %46 : vector<128x128xf32>
    %cst_16 = arith.constant 1.000000e+00 : f32
    %48 = vector.broadcast %cst_16 : f32 to vector<128x128xf32>
    %49 = arith.addf %48, %47 : vector<128x128xf32>
    %50 = tpu.reciprocal %49 {approx = true} : vector<128x128xf32> -> vector<128x128xf32>
    %51 = arith.mulf %44, %50 : vector<128x128xf32>
    %c2 = arith.constant 2 : index
    %c0_17 = arith.constant 0 : index
    %c0_18 = arith.constant 0 : index
    %52 = vector.load %arg3[%c2, %c0_17, %c0_18] : memref<7x128x128xbf16, #tpu.memory_space<vmem>>, vector<1x128x128xbf16>
    %53 = vector.shape_cast %52 : vector<1x128x128xbf16> to vector<128x128xbf16>
    %54 = arith.truncf %51 : vector<128x128xf32> to vector<128x128xbf16>
    %cst_19 = arith.constant dense<0.000000e+00> : vector<128x128xf32>
    %55 = tpu.matmul %53, %54, %cst_19 {dimension_numbers = #tpu.dot_dimension_numbers<[1], [0], [0], [1], [0, 0, 1, 1], [], []>} : vector<128x128xbf16>, vector<128x128xbf16>, vector<128x128xf32> -> vector<128x128xf32>
    %56 = vector.extract_strided_slice %2 {offsets = [0, 3], sizes = [128, 1], strides = [1, 1]} : vector<128x8xf32> to vector<128x1xf32>
    %57 = vector.broadcast %56 : vector<128x1xf32> to vector<128x128xf32>
    %58 = arith.addf %55, %57 : vector<128x128xf32>
    %cst_20 = arith.constant 0.000000e+00 : f32
    %59 = vector.broadcast %cst_20 : f32 to vector<128x128xf32>
    %60 = arith.subf %59, %58 : vector<128x128xf32>
    %61 = math.exp %60 : vector<128x128xf32>
    %cst_21 = arith.constant 1.000000e+00 : f32
    %62 = vector.broadcast %cst_21 : f32 to vector<128x128xf32>
    %63 = arith.addf %62, %61 : vector<128x128xf32>
    %64 = tpu.reciprocal %63 {approx = true} : vector<128x128xf32> -> vector<128x128xf32>
    %65 = arith.mulf %58, %64 : vector<128x128xf32>
    %c3 = arith.constant 3 : index
    %c0_22 = arith.constant 0 : index
    %c0_23 = arith.constant 0 : index
    %66 = vector.load %arg3[%c3, %c0_22, %c0_23] : memref<7x128x128xbf16, #tpu.memory_space<vmem>>, vector<1x128x128xbf16>
    %67 = vector.shape_cast %66 : vector<1x128x128xbf16> to vector<128x128xbf16>
    %68 = arith.truncf %65 : vector<128x128xf32> to vector<128x128xbf16>
    %cst_24 = arith.constant dense<0.000000e+00> : vector<128x128xf32>
    %69 = tpu.matmul %67, %68, %cst_24 {dimension_numbers = #tpu.dot_dimension_numbers<[1], [0], [0], [1], [0, 0, 1, 1], [], []>} : vector<128x128xbf16>, vector<128x128xbf16>, vector<128x128xf32> -> vector<128x128xf32>
    %70 = vector.extract_strided_slice %2 {offsets = [0, 4], sizes = [128, 1], strides = [1, 1]} : vector<128x8xf32> to vector<128x1xf32>
    %71 = vector.broadcast %70 : vector<128x1xf32> to vector<128x128xf32>
    %72 = arith.addf %69, %71 : vector<128x128xf32>
    %cst_25 = arith.constant 0.000000e+00 : f32
    %73 = vector.broadcast %cst_25 : f32 to vector<128x128xf32>
    %74 = arith.subf %73, %72 : vector<128x128xf32>
    %75 = math.exp %74 : vector<128x128xf32>
    %cst_26 = arith.constant 1.000000e+00 : f32
    %76 = vector.broadcast %cst_26 : f32 to vector<128x128xf32>
    %77 = arith.addf %76, %75 : vector<128x128xf32>
    %78 = tpu.reciprocal %77 {approx = true} : vector<128x128xf32> -> vector<128x128xf32>
    %79 = arith.mulf %72, %78 : vector<128x128xf32>
    %c4 = arith.constant 4 : index
    %c0_27 = arith.constant 0 : index
    %c0_28 = arith.constant 0 : index
    %80 = vector.load %arg3[%c4, %c0_27, %c0_28] : memref<7x128x128xbf16, #tpu.memory_space<vmem>>, vector<1x128x128xbf16>
    %81 = vector.shape_cast %80 : vector<1x128x128xbf16> to vector<128x128xbf16>
    %82 = arith.truncf %79 : vector<128x128xf32> to vector<128x128xbf16>
    %cst_29 = arith.constant dense<0.000000e+00> : vector<128x128xf32>
    %83 = tpu.matmul %81, %82, %cst_29 {dimension_numbers = #tpu.dot_dimension_numbers<[1], [0], [0], [1], [0, 0, 1, 1], [], []>} : vector<128x128xbf16>, vector<128x128xbf16>, vector<128x128xf32> -> vector<128x128xf32>
    %84 = vector.extract_strided_slice %2 {offsets = [0, 5], sizes = [128, 1], strides = [1, 1]} : vector<128x8xf32> to vector<128x1xf32>
    %85 = vector.broadcast %84 : vector<128x1xf32> to vector<128x128xf32>
    %86 = arith.addf %83, %85 : vector<128x128xf32>
    %cst_30 = arith.constant 0.000000e+00 : f32
    %87 = vector.broadcast %cst_30 : f32 to vector<128x128xf32>
    %88 = arith.subf %87, %86 : vector<128x128xf32>
    %89 = math.exp %88 : vector<128x128xf32>
    %cst_31 = arith.constant 1.000000e+00 : f32
    %90 = vector.broadcast %cst_31 : f32 to vector<128x128xf32>
    %91 = arith.addf %90, %89 : vector<128x128xf32>
    %92 = tpu.reciprocal %91 {approx = true} : vector<128x128xf32> -> vector<128x128xf32>
    %93 = arith.mulf %86, %92 : vector<128x128xf32>
    %c5 = arith.constant 5 : index
    %c0_32 = arith.constant 0 : index
    %c0_33 = arith.constant 0 : index
    %94 = vector.load %arg3[%c5, %c0_32, %c0_33] : memref<7x128x128xbf16, #tpu.memory_space<vmem>>, vector<1x128x128xbf16>
    %95 = vector.shape_cast %94 : vector<1x128x128xbf16> to vector<128x128xbf16>
    %96 = arith.truncf %93 : vector<128x128xf32> to vector<128x128xbf16>
    %cst_34 = arith.constant dense<0.000000e+00> : vector<128x128xf32>
    %97 = tpu.matmul %95, %96, %cst_34 {dimension_numbers = #tpu.dot_dimension_numbers<[1], [0], [0], [1], [0, 0, 1, 1], [], []>} : vector<128x128xbf16>, vector<128x128xbf16>, vector<128x128xf32> -> vector<128x128xf32>
    %98 = vector.extract_strided_slice %2 {offsets = [0, 6], sizes = [128, 1], strides = [1, 1]} : vector<128x8xf32> to vector<128x1xf32>
    %99 = vector.broadcast %98 : vector<128x1xf32> to vector<128x128xf32>
    %100 = arith.addf %97, %99 : vector<128x128xf32>
    %cst_35 = arith.constant 0.000000e+00 : f32
    %101 = vector.broadcast %cst_35 : f32 to vector<128x128xf32>
    %102 = arith.subf %101, %100 : vector<128x128xf32>
    %103 = math.exp %102 : vector<128x128xf32>
    %cst_36 = arith.constant 1.000000e+00 : f32
    %104 = vector.broadcast %cst_36 : f32 to vector<128x128xf32>
    %105 = arith.addf %104, %103 : vector<128x128xf32>
    %106 = tpu.reciprocal %105 {approx = true} : vector<128x128xf32> -> vector<128x128xf32>
    %107 = arith.mulf %100, %106 : vector<128x128xf32>
    %c6 = arith.constant 6 : index
    %c0_37 = arith.constant 0 : index
    %c0_38 = arith.constant 0 : index
    %108 = vector.load %arg3[%c6, %c0_37, %c0_38] : memref<7x128x128xbf16, #tpu.memory_space<vmem>>, vector<1x128x128xbf16>
    %109 = vector.shape_cast %108 : vector<1x128x128xbf16> to vector<128x128xbf16>
    %110 = arith.truncf %107 : vector<128x128xf32> to vector<128x128xbf16>
    %cst_39 = arith.constant dense<0.000000e+00> : vector<128x128xf32>
    %111 = tpu.matmul %109, %110, %cst_39 {dimension_numbers = #tpu.dot_dimension_numbers<[1], [0], [0], [1], [0, 0, 1, 1], [], []>} : vector<128x128xbf16>, vector<128x128xbf16>, vector<128x128xf32> -> vector<128x128xf32>
    %112 = vector.extract_strided_slice %2 {offsets = [0, 7], sizes = [128, 1], strides = [1, 1]} : vector<128x8xf32> to vector<128x1xf32>
    %113 = vector.broadcast %112 : vector<128x1xf32> to vector<128x128xf32>
    %114 = arith.addf %111, %113 : vector<128x128xf32>
    %115 = vector.extract_strided_slice %114 {offsets = [0, 0], sizes = [3, 128], strides = [1, 1]} : vector<128x128xf32> to vector<3x128xf32>
    %c0_40 = arith.constant 0 : index
    %c0_41 = arith.constant 0 : index
    %116 = vector.load %arg5[%c0_40, %c0_41] : memref<3x128xf32, #tpu.memory_space<vmem>>, vector<3x128xf32>
    tpu.vector_store %arg5[%c0_40, %c0_41], %115 {strides = array<i32>} : memref<3x128xf32, #tpu.memory_space<vmem>>, vector<3x128xf32>,
    return
  }
  func.func @transform_0(%arg0: i32) -> (i32, i32) {
    %c0_i32 = arith.constant 0 : i32
    %c0_i32_0 = arith.constant 0 : i32
    return %c0_i32, %arg0 : i32, i32
  }
  func.func @transform_1(%arg0: i32) -> (i32, i32) {
    %c0_i32 = arith.constant 0 : i32
    %c0_i32_0 = arith.constant 0 : i32
    %c0_i32_1 = arith.constant 0 : i32
    return %c0_i32, %c0_i32_0 : i32, i32
  }
  func.func @transform_2(%arg0: i32) -> (i32, i32, i32) {
    %c0_i32 = arith.constant 0 : i32
    %c0_i32_0 = arith.constant 0 : i32
    %c0_i32_1 = arith.constant 0 : i32
    %c0_i32_2 = arith.constant 0 : i32
    return %c0_i32, %c0_i32_0, %c0_i32_1 : i32, i32, i32
  }
  func.func @transform_3(%arg0: i32) -> (i32, i32) {
    %c0_i32 = arith.constant 0 : i32
    %c0_i32_0 = arith.constant 0 : i32
    %c0_i32_1 = arith.constant 0 : i32
    return %c0_i32, %c0_i32_0 : i32, i32
  }
  func.func @transform_4(%arg0: i32) -> (i32, i32) {
    %c0_i32 = arith.constant 0 : i32
    %c0_i32_0 = arith.constant 0 : i32
    return %c0_i32, %arg0 : i32, i32
  }
}

</mosaic_0001>

<llo_original>
// kernel: _run_kernel.1
$region0: #{_run_kernel.1}
  #allocation0 [shape = 'u32[]', space=smem, size = 0x4, offset = 0x4, fixed_abs, tag = 'smem constant byte address 0x4 - core index']
  #allocation1 [shape = 'u32[144,128]{1,0:T(1,128)}', space=vmem, size = 0x12000, scoped, tag = 'internal scratch']
  %s0 = inlined_call_operand.vmem [shape: f32[2,128], index: 0, kind: input, shape index: {}]
  %s1 = inlined_call_operand.vmem [shape: f32[128,2], index: 1, kind: input, shape index: {}]
  %s2 = inlined_call_operand.hbm [shape: bf16[7,128,128], index: 2, kind: input, shape index: {}]
  %s3 = inlined_call_operand.vmem [shape: f32[128,8], index: 3, kind: input, shape index: {}]
  %s4 = inlined_call_operand.hbm [shape: f32[3,128], index: 4, kind: output, shape index: {}]
  %s5 = sld [smem:[#allocation0]]
  $region30: #{_run_kernel.1} parent=0
    _
  %s7 = ssub.s32 1, %s5
  %s8 = scalar_select 0, %s7, %s5
  $region1: #{_run_kernel.1} parent=0
    #allocation2 [shape = 'u8[229376]{0}', space=vmem, size = 0x38000, scoped, tag = 'input window, operand 2, single buffered']
    #allocation3 [shape = 's32[1]{0}', space=sflag, size = 0x4, scoped, tag = 'scoped memory for _run_kernel.1']
    #allocation4 [shape = 's32[1]{0}', space=sflag, size = 0x4, scoped, tag = 'scoped memory for _run_kernel.1']
    #allocation5 [shape = 'u8[2048]{0}', space=vmem, size = 0x800, scoped, tag = 'output window, operand 0, single buffered']
    %9 = vsyncpa [#allocation3], 0
    %10 = vsyncpa [#allocation4], 0
    // Predicated region
    $region2: #{_run_kernel.1} parent=1 // pred_check
      _
    $region3: #{_run_kernel.1} parent=1 // pred_check_branch
      %12 = sbr.rel (0) target = $region5
    $region4: #{_run_kernel.1} parent=1 // pred_region
      _
    $region5: #{_run_kernel.1} parent=1 // pred_fallthru
      _
    // Predicated region
    $region6: #{_run_kernel.1} parent=1 // pred_check
      _
    $region7: #{_run_kernel.1} parent=1 // pred_check_branch
      %14 = sbr.rel (0) target = $region9
    $region8: #{_run_kernel.1} parent=1 // pred_region
      _
    $region9: #{_run_kernel.1} parent=1 // pred_fallthru
      _
    // Predicated region
    $region10: #{_run_kernel.1} parent=1 // pred_check
      _
    $region11: #{_run_kernel.1} parent=1 // pred_check_branch
      %16 = sbr.rel (0) target = $region13
    $region12: #{_run_kernel.1} parent=1 // pred_region
      %s18 = ssub.s32 7168, 7168
      %19 = vsyncadd [#allocation3], %s18
      %s20 = sshll.u32 [#allocation2], 4
      %s21 = int_to_ptr.vmem [resolvable:$true] %s20
      %26 = dma.hbm_to_vmem [thread:$0]  %s2, 7168, %s21, [#allocation3], 64, 64, 4
    $region13: #{_run_kernel.1} parent=1 // pred_fallthru
      _
    // Predicated region
    $region14: #{_run_kernel.1} parent=1 // pred_check
      _
    $region15: #{_run_kernel.1} parent=1 // pred_check_branch
      %28 = sbr.rel (0) target = $region17
    $region16: #{_run_kernel.1} parent=1 // pred_region
      _
    $region17: #{_run_kernel.1} parent=1 // pred_fallthru
      _
    // Predicated region
    $region18: #{_run_kernel.1} parent=1 // pred_check
      _
    $region19: #{_run_kernel.1} parent=1 // pred_check_branch
      %30 = sbr.rel (0) target = $region21
    $region20: #{_run_kernel.1} parent=1 // pred_region
      %31 = dma.done [#allocation3], 7168
    $region21: #{_run_kernel.1} parent=1 // pred_fallthru
      _
    %v33 = vld [vmem:[%s0] sm:$0x3]
    %v34 = vld [vmem:[%s1] sm:$0xff]
    %v35 = vld [vmem:[%s1 + $0x8] sm:$0xff]
    %v36 = vld [vmem:[%s1 + $0x10] sm:$0xff]
    %v37 = vld [vmem:[%s1 + $0x18] sm:$0xff]
    %v38 = vld [vmem:[%s1 + $0x20] sm:$0xff]
    %v39 = vld [vmem:[%s1 + $0x28] sm:$0xff]
    %v40 = vld [vmem:[%s1 + $0x30] sm:$0xff]
    %v41 = vld [vmem:[%s1 + $0x38] sm:$0xff]
    %v42 = vld [vmem:[%s1 + $0x40] sm:$0xff]
    %v43 = vld [vmem:[%s1 + $0x48] sm:$0xff]
    %v44 = vld [vmem:[%s1 + $0x50] sm:$0xff]
    %v45 = vld [vmem:[%s1 + $0x58] sm:$0xff]
    %v46 = vld [vmem:[%s1 + $0x60] sm:$0xff]
    %v47 = vld [vmem:[%s1 + $0x68] sm:$0xff]
    %v48 = vld [vmem:[%s1 + $0x70] sm:$0xff]
    %v49 = vld [vmem:[%s1 + $0x78] sm:$0xff]
    %v50 = vld [vmem:[%s3] sm:$0xff]
    %v51 = vld [vmem:[%s3 + $0x8] sm:$0xff]
    %v52 = vld [vmem:[%s3 + $0x10] sm:$0xff]
    %v53 = vld [vmem:[%s3 + $0x18] sm:$0xff]
    %v54 = vld [vmem:[%s3 + $0x20] sm:$0xff]
    %v55 = vld [vmem:[%s3 + $0x28] sm:$0xff]
    %v56 = vld [vmem:[%s3 + $0x30] sm:$0xff]
    %v57 = vld [vmem:[%s3 + $0x38] sm:$0xff]
    %v58 = vld [vmem:[%s3 + $0x40] sm:$0xff]
    %v59 = vld [vmem:[%s3 + $0x48] sm:$0xff]
    %v60 = vld [vmem:[%s3 + $0x50] sm:$0xff]
    %v61 = vld [vmem:[%s3 + $0x58] sm:$0xff]
    %v62 = vld [vmem:[%s3 + $0x60] sm:$0xff]
    %v63 = vld [vmem:[%s3 + $0x68] sm:$0xff]
    %v64 = vld [vmem:[%s3 + $0x70] sm:$0xff]
    %v65 = vld [vmem:[%s3 + $0x78] sm:$0xff]
    %67 = vset.pattern.permute.xlu0 0
    %68 = vperm.xlu0 %67, %v34
    %v69 = vpop.permute.xlu0 %68
    %72 = vset.pattern.permute.xlu0 0
    %73 = vperm.xlu0 %72, %v35
    %v74 = vpop.permute.xlu0 %73
    %77 = vset.pattern.permute.xlu0 0
    %78 = vperm.xlu0 %77, %v36
    %v79 = vpop.permute.xlu0 %78
    %82 = vset.pattern.permute.xlu0 0
    %83 = vperm.xlu0 %82, %v37
    %v84 = vpop.permute.xlu0 %83
    %87 = vset.pattern.permute.xlu0 0
    %88 = vperm.xlu0 %87, %v38
    %v89 = vpop.permute.xlu0 %88
    %92 = vset.pattern.permute.xlu0 0
    %93 = vperm.xlu0 %92, %v39
    %v94 = vpop.permute.xlu0 %93
    %97 = vset.pattern.permute.xlu0 0
    %98 = vperm.xlu0 %97, %v40
    %v99 = vpop.permute.xlu0 %98
    %102 = vset.pattern.permute.xlu0 0
    %103 = vperm.xlu0 %102, %v41
    %v104 = vpop.permute.xlu0 %103
    %107 = vset.pattern.permute.xlu0 0
    %108 = vperm.xlu0 %107, %v42
    %v109 = vpop.permute.xlu0 %108
    %112 = vset.pattern.permute.xlu0 0
    %113 = vperm.xlu0 %112, %v43
    %v114 = vpop.permute.xlu0 %113
    %117 = vset.pattern.permute.xlu0 0
    %118 = vperm.xlu0 %117, %v44
    %v119 = vpop.permute.xlu0 %118
    %122 = vset.pattern.permute.xlu0 0
    %123 = vperm.xlu0 %122, %v45
    %v124 = vpop.permute.xlu0 %123
    %127 = vset.pattern.permute.xlu0 0
    %128 = vperm.xlu0 %127, %v46
    %v129 = vpop.permute.xlu0 %128
    %132 = vset.pattern.permute.xlu0 0
    %133 = vperm.xlu0 %132, %v47
    %v134 = vpop.permute.xlu0 %133
    %137 = vset.pattern.permute.xlu0 0
    %138 = vperm.xlu0 %137, %v48
    %v139 = vpop.permute.xlu0 %138
    %142 = vset.pattern.permute.xlu0 0
    %143 = vperm.xlu0 %142, %v49
    %v144 = vpop.permute.xlu0 %143
    %v146 = vlaneseq
    %v147 = vshrl.u32 %v146, 7
    %v148 = vsub.s32 0, %v147
    %v149 = vrot.slane %v33, %v148
    %v150 = vmul.f32 %v69, %v149
    %v151 = vmul.f32 %v74, %v149
    %v152 = vmul.f32 %v79, %v149
    %v153 = vmul.f32 %v84, %v149
    %v154 = vmul.f32 %v89, %v149
    %v155 = vmul.f32 %v94, %v149
    %v156 = vmul.f32 %v99, %v149
    %v157 = vmul.f32 %v104, %v149
    %v158 = vmul.f32 %v109, %v149
    %v159 = vmul.f32 %v114, %v149
    %v160 = vmul.f32 %v119, %v149
    %v161 = vmul.f32 %v124, %v149
    %v162 = vmul.f32 %v129, %v149
    %v163 = vmul.f32 %v134, %v149
    %v164 = vmul.f32 %v139, %v149
    %v165 = vmul.f32 %v144, %v149
    %166 = vset.pattern.permute.xlu0 1
    %167 = vperm.xlu0 %166, %v34
    %v168 = vpop.permute.xlu0 %167
    %170 = vset.pattern.permute.xlu0 1
    %171 = vperm.xlu0 %170, %v35
    %v172 = vpop.permute.xlu0 %171
    %174 = vset.pattern.permute.xlu0 1
    %175 = vperm.xlu0 %174, %v36
    %v176 = vpop.permute.xlu0 %175
    %178 = vset.pattern.permute.xlu0 1
    %179 = vperm.xlu0 %178, %v37
    %v180 = vpop.permute.xlu0 %179
    %182 = vset.pattern.permute.xlu0 1
    %183 = vperm.xlu0 %182, %v38
    %v184 = vpop.permute.xlu0 %183
    %186 = vset.pattern.permute.xlu0 1
    %187 = vperm.xlu0 %186, %v39
    %v188 = vpop.permute.xlu0 %187
    %190 = vset.pattern.permute.xlu0 1
    %191 = vperm.xlu0 %190, %v40
    %v192 = vpop.permute.xlu0 %191
    %194 = vset.pattern.permute.xlu0 1
    %195 = vperm.xlu0 %194, %v41
    %v196 = vpop.permute.xlu0 %195
    %198 = vset.pattern.permute.xlu0 1
    %199 = vperm.xlu0 %198, %v42
    %v200 = vpop.permute.xlu0 %199
    %202 = vset.pattern.permute.xlu0 1
    %203 = vperm.xlu0 %202, %v43
    %v204 = vpop.permute.xlu0 %203
    %206 = vset.pattern.permute.xlu0 1
    %207 = vperm.xlu0 %206, %v44
    %v208 = vpop.permute.xlu0 %207
    %210 = vset.pattern.permute.xlu0 1
    %211 = vperm.xlu0 %210, %v45
    %v212 = vpop.permute.xlu0 %211
    %214 = vset.pattern.permute.xlu0 1
    %215 = vperm.xlu0 %214, %v46
    %v216 = vpop.permute.xlu0 %215
    %218 = vset.pattern.permute.xlu0 1
    %219 = vperm.xlu0 %218, %v47
    %v220 = vpop.permute.xlu0 %219
    %222 = vset.pattern.permute.xlu0 1
    %223 = vperm.xlu0 %222, %v48
    %v224 = vpop.permute.xlu0 %223
    %226 = vset.pattern.permute.xlu0 1
    %227 = vperm.xlu0 %226, %v49
    %v228 = vpop.permute.xlu0 %227
    %v230 = vlaneseq
    %v231 = vshrl.u32 %v230, 7
    %v232 = vsub.s32 1, %v231
    %v233 = vrot.slane %v33, %v232
    %v234 = vmul.f32 %v168, %v233
    %v235 = vmul.f32 %v172, %v233
    %v236 = vmul.f32 %v176, %v233
    %v237 = vmul.f32 %v180, %v233
    %v238 = vmul.f32 %v184, %v233
    %v239 = vmul.f32 %v188, %v233
    %v240 = vmul.f32 %v192, %v233
    %v241 = vmul.f32 %v196, %v233
    %v242 = vmul.f32 %v200, %v233
    %v243 = vmul.f32 %v204, %v233
    %v244 = vmul.f32 %v208, %v233
    %v245 = vmul.f32 %v212, %v233
    %v246 = vmul.f32 %v216, %v233
    %v247 = vmul.f32 %v220, %v233
    %v248 = vmul.f32 %v224, %v233
    %v249 = vmul.f32 %v228, %v233
    %v250 = vadd.f32 %v150, %v234
    %v251 = vadd.f32 %v151, %v235
    %v252 = vadd.f32 %v152, %v236
    %v253 = vadd.f32 %v153, %v237
    %v254 = vadd.f32 %v154, %v238
    %v255 = vadd.f32 %v155, %v239
    %v256 = vadd.f32 %v156, %v240
    %v257 = vadd.f32 %v157, %v241
    %v258 = vadd.f32 %v158, %v242
    %v259 = vadd.f32 %v159, %v243
    %v260 = vadd.f32 %v160, %v244
    %v261 = vadd.f32 %v161, %v245
    %v262 = vadd.f32 %v162, %v246
    %v263 = vadd.f32 %v163, %v247
    %v264 = vadd.f32 %v164, %v248
    %v265 = vadd.f32 %v165, %v249
    %267 = vset.pattern.permute.xlu0 0
    %268 = vperm.xlu0 %267, %v50
    %v269 = vpop.permute.xlu0 %268
    %272 = vset.pattern.permute.xlu0 0
    %273 = vperm.xlu0 %272, %v51
    %v274 = vpop.permute.xlu0 %273
    %277 = vset.pattern.permute.xlu0 0
    %278 = vperm.xlu0 %277, %v52
    %v279 = vpop.permute.xlu0 %278
    %282 = vset.pattern.permute.xlu0 0
    %283 = vperm.xlu0 %282, %v53
    %v284 = vpop.permute.xlu0 %283
    %287 = vset.pattern.permute.xlu0 0
    %288 = vperm.xlu0 %287, %v54
    %v289 = vpop.permute.xlu0 %288
    %292 = vset.pattern.permute.xlu0 0
    %293 = vperm.xlu0 %292, %v55
    %v294 = vpop.permute.xlu0 %293
    %297 = vset.pattern.permute.xlu0 0
    %298 = vperm.xlu0 %297, %v56
    %v299 = vpop.permute.xlu0 %298
    %302 = vset.pattern.permute.xlu0 0
    %303 = vperm.xlu0 %302, %v57
    %v304 = vpop.permute.xlu0 %303
    %307 = vset.pattern.permute.xlu0 0
    %308 = vperm.xlu0 %307, %v58
    %v309 = vpop.permute.xlu0 %308
    %312 = vset.pattern.permute.xlu0 0
    %313 = vperm.xlu0 %312, %v59
    %v314 = vpop.permute.xlu0 %313
    %317 = vset.pattern.permute.xlu0 0
    %318 = vperm.xlu0 %317, %v60
    %v319 = vpop.permute.xlu0 %318
    %322 = vset.pattern.permute.xlu0 0
    %323 = vperm.xlu0 %322, %v61
    %v324 = vpop.permute.xlu0 %323
    %327 = vset.pattern.permute.xlu0 0
    %328 = vperm.xlu0 %327, %v62
    %v329 = vpop.permute.xlu0 %328
    %332 = vset.pattern.permute.xlu0 0
    %333 = vperm.xlu0 %332, %v63
    %v334 = vpop.permute.xlu0 %333
    %337 = vset.pattern.permute.xlu0 0
    %338 = vperm.xlu0 %337, %v64
    %v339 = vpop.permute.xlu0 %338
    %342 = vset.pattern.permute.xlu0 0
    %343 = vperm.xlu0 %342, %v65
    %v344 = vpop.permute.xlu0 %343
    %v346 = vadd.f32 %v250, %v269
    %v347 = vadd.f32 %v251, %v274
    %v348 = vadd.f32 %v252, %v279
    %v349 = vadd.f32 %v253, %v284
    %v350 = vadd.f32 %v254, %v289
    %v351 = vadd.f32 %v255, %v294
    %v352 = vadd.f32 %v256, %v299
    %v353 = vadd.f32 %v257, %v304
    %v354 = vadd.f32 %v258, %v309
    %v355 = vadd.f32 %v259, %v314
    %v356 = vadd.f32 %v260, %v319
    %v357 = vadd.f32 %v261, %v324
    %v358 = vadd.f32 %v262, %v329
    %v359 = vadd.f32 %v263, %v334
    %v360 = vadd.f32 %v264, %v339
    %v361 = vadd.f32 %v265, %v344
    %v362 = vsub.f32 0.0, %v346
    %v363 = vsub.f32 0.0, %v347
    %v364 = vsub.f32 0.0, %v348
    %v365 = vsub.f32 0.0, %v349
    %v366 = vsub.f32 0.0, %v350
    %v367 = vsub.f32 0.0, %v351
    %v368 = vsub.f32 0.0, %v352
    %v369 = vsub.f32 0.0, %v353
    %v370 = vsub.f32 0.0, %v354
    %v371 = vsub.f32 0.0, %v355
    %v372 = vsub.f32 0.0, %v356
    %v373 = vsub.f32 0.0, %v357
    %v374 = vsub.f32 0.0, %v358
    %v375 = vsub.f32 0.0, %v359
    %v376 = vsub.f32 0.0, %v360
    %v377 = vsub.f32 0.0, %v361
    %v378 = vmul.f32 %v362, 1.442695
    %v379 = vpow.pop %v378
    %v380 = vmul.f32 %v363, 1.442695
    %v381 = vpow.pop %v380
    %v382 = vmul.f32 %v364, 1.442695
    %v383 = vpow.pop %v382
    %v384 = vmul.f32 %v365, 1.442695
    %v385 = vpow.pop %v384
    %v386 = vmul.f32 %v366, 1.442695
    %v387 = vpow.pop %v386
    %v388 = vmul.f32 %v367, 1.442695
    %v389 = vpow.pop %v388
    %v390 = vmul.f32 %v368, 1.442695
    %v391 = vpow.pop %v390
    %v392 = vmul.f32 %v369, 1.442695
    %v393 = vpow.pop %v392
    %v394 = vmul.f32 %v370, 1.442695
    %v395 = vpow.pop %v394
    %v396 = vmul.f32 %v371, 1.442695
    %v397 = vpow.pop %v396
    %v398 = vmul.f32 %v372, 1.442695
    %v399 = vpow.pop %v398
    %v400 = vmul.f32 %v373, 1.442695
    %v401 = vpow.pop %v400
    %v402 = vmul.f32 %v374, 1.442695
    %v403 = vpow.pop %v402
    %v404 = vmul.f32 %v375, 1.442695
    %v405 = vpow.pop %v404
    %v406 = vmul.f32 %v376, 1.442695
    %v407 = vpow.pop %v406
    %v408 = vmul.f32 %v377, 1.442695
    %v409 = vpow.pop %v408
    %v410 = vadd.f32 %v379, 1.0
    %v411 = vadd.f32 %v381, 1.0
    %v412 = vadd.f32 %v383, 1.0
    %v413 = vadd.f32 %v385, 1.0
    %v414 = vadd.f32 %v387, 1.0
    %v415 = vadd.f32 %v389, 1.0
    %v416 = vadd.f32 %v391, 1.0
    %v417 = vadd.f32 %v393, 1.0
    %v418 = vadd.f32 %v395, 1.0
    %v419 = vadd.f32 %v397, 1.0
    %v420 = vadd.f32 %v399, 1.0
    %v421 = vadd.f32 %v401, 1.0
    %v422 = vadd.f32 %v403, 1.0
    %v423 = vadd.f32 %v405, 1.0
    %v424 = vadd.f32 %v407, 1.0
    %v425 = vadd.f32 %v409, 1.0
    %v426 = vrcp.pop %v410
    %v427 = vrcp.pop %v411
    %v428 = vrcp.pop %v412
    %v429 = vrcp.pop %v413
    %v430 = vrcp.pop %v414
    %v431 = vrcp.pop %v415
    %v432 = vrcp.pop %v416
    %v433 = vrcp.pop %v417
    %v434 = vrcp.pop %v418
    %v435 = vrcp.pop %v419
    %v436 = vrcp.pop %v420
    %v437 = vrcp.pop %v421
    %v438 = vrcp.pop %v422
    %v439 = vrcp.pop %v423
    %v440 = vrcp.pop %v424
    %v441 = vrcp.pop %v425
    %v442 = vmul.f32 %v346, %v426
    %v443 = vmul.f32 %v347, %v427
    %v444 = vmul.f32 %v348, %v428
    %v445 = vmul.f32 %v349, %v429
    %v446 = vmul.f32 %v350, %v430
    %v447 = vmul.f32 %v351, %v431
    %v448 = vmul.f32 %v352, %v432
    %v449 = vmul.f32 %v353, %v433
    %v450 = vmul.f32 %v354, %v434
    %v451 = vmul.f32 %v355, %v435
    %v452 = vmul.f32 %v356, %v436
    %v453 = vmul.f32 %v357, %v437
    %v454 = vmul.f32 %v358, %v438
    %v455 = vmul.f32 %v359, %v439
    %v456 = vmul.f32 %v360, %v440
    %v457 = vmul.f32 %v361, %v441
    %v458 = vld [vmem:[#allocation2] sm:$0xf]
    %v459 = vld [vmem:[#allocation2 + $0x4] sm:$0xf]
    %v460 = vld [vmem:[#allocation2 + $0x8] sm:$0xf]
    %v461 = vld [vmem:[#allocation2 + $0xc] sm:$0xf]
    %v462 = vld [vmem:[#allocation2 + $0x10] sm:$0xf]
    %v463 = vld [vmem:[#allocation2 + $0x14] sm:$0xf]
    %v464 = vld [vmem:[#allocation2 + $0x18] sm:$0xf]
    %v465 = vld [vmem:[#allocation2 + $0x1c] sm:$0xf]
    %v466 = vld [vmem:[#allocation2 + $0x20] sm:$0xf]
    %v467 = vld [vmem:[#allocation2 + $0x24] sm:$0xf]
    %v468 = vld [vmem:[#allocation2 + $0x28] sm:$0xf]
    %v469 = vld [vmem:[#allocation2 + $0x2c] sm:$0xf]
    %v470 = vld [vmem:[#allocation2 + $0x30] sm:$0xf]
    %v471 = vld [vmem:[#allocation2 + $0x34] sm:$0xf]
    %v472 = vld [vmem:[#allocation2 + $0x38] sm:$0xf]
    %v473 = vld [vmem:[#allocation2 + $0x3c] sm:$0xf]
    %v474 = vpack.c.bf16 %v443, %v442
    %v475 = vpack.c.bf16 %v445, %v444
    %v476 = vpack.c.bf16 %v447, %v446
    %v477 = vpack.c.bf16 %v449, %v448
    %v478 = vpack.c.bf16 %v451, %v450
    %v479 = vpack.c.bf16 %v453, %v452
    %v480 = vpack.c.bf16 %v455, %v454
    %v481 = vpack.c.bf16 %v457, %v456
    %482 = vset.pattern.permute.xlu0 1
    %483 = vperm.xlu0 %482, %v50
    %v484 = vpop.permute.xlu0 %483
    %486 = vset.pattern.permute.xlu0 1
    %487 = vperm.xlu0 %486, %v51
    %v488 = vpop.permute.xlu0 %487
    %490 = vset.pattern.permute.xlu0 1
    %491 = vperm.xlu0 %490, %v52
    %v492 = vpop.permute.xlu0 %491
    %494 = vset.pattern.permute.xlu0 1
    %495 = vperm.xlu0 %494, %v53
    %v496 = vpop.permute.xlu0 %495
    %498 = vset.pattern.permute.xlu0 1
    %499 = vperm.xlu0 %498, %v54
    %v500 = vpop.permute.xlu0 %499
    %502 = vset.pattern.permute.xlu0 1
    %503 = vperm.xlu0 %502, %v55
    %v504 = vpop.permute.xlu0 %503
    %506 = vset.pattern.permute.xlu0 1
    %507 = vperm.xlu0 %506, %v56
    %v508 = vpop.permute.xlu0 %507
    %510 = vset.pattern.permute.xlu0 1
    %511 = vperm.xlu0 %510, %v57
    %v512 = vpop.permute.xlu0 %511
    %514 = vset.pattern.permute.xlu0 1
    %515 = vperm.xlu0 %514, %v58
    %v516 = vpop.permute.xlu0 %515
    %518 = vset.pattern.permute.xlu0 1
    %519 = vperm.xlu0 %518, %v59
    %v520 = vpop.permute.xlu0 %519
    %522 = vset.pattern.permute.xlu0 1
    %523 = vperm.xlu0 %522, %v60
    %v524 = vpop.permute.xlu0 %523
    %526 = vset.pattern.permute.xlu0 1
    %527 = vperm.xlu0 %526, %v61
    %v528 = vpop.permute.xlu0 %527
    %530 = vset.pattern.permute.xlu0 1
    %531 = vperm.xlu0 %530, %v62
    %v532 = vpop.permute.xlu0 %531
    %534 = vset.pattern.permute.xlu0 1
    %535 = vperm.xlu0 %534, %v63
    %v536 = vpop.permute.xlu0 %535
    %538 = vset.pattern.permute.xlu0 1
    %539 = vperm.xlu0 %538, %v64
    %v540 = vpop.permute.xlu0 %539
    %542 = vset.pattern.permute.xlu0 1
    %543 = vperm.xlu0 %542, %v65
    %v544 = vpop.permute.xlu0 %543
    %v562 = vunpack.c.l.b16 %v458
    %v563 = vunpack.c.l.b16 %v459
    %v564 = vunpack.c.l.b16 %v460
    %v565 = vunpack.c.l.b16 %v461
    %v566 = vunpack.c.l.b16 %v462
    %v567 = vunpack.c.l.b16 %v463
    %v568 = vunpack.c.l.b16 %v464
    %v569 = vunpack.c.l.b16 %v465
    %v570 = vunpack.c.l.b16 %v466
    %v571 = vunpack.c.l.b16 %v467
    %v572 = vunpack.c.l.b16 %v468
    %v573 = vunpack.c.l.b16 %v469
    %v574 = vunpack.c.l.b16 %v470
    %v575 = vunpack.c.l.b16 %v471
    %v576 = vunpack.c.l.b16 %v472
    %v577 = vunpack.c.l.b16 %v473
    %v578 = vpack.c.b16 %v563, %v562
    %v579 = vpack.c.b16 %v565, %v564
    %v580 = vpack.c.b16 %v567, %v566
    %v581 = vpack.c.b16 %v569, %v568
    %v582 = vpack.c.b16 %v571, %v570
    %v583 = vpack.c.b16 %v573, %v572
    %v584 = vpack.c.b16 %v575, %v574
    %v585 = vpack.c.b16 %v577, %v576
    %594 = vmatprep.subr.bf16.mxu0 0
    %595 = vmatpush1.bf16.msra.mxu0 %v481
    %596 = vmatprep.subr.bf16.mxu0 0
    %597 = vmatpush1.bf16.msra.mxu0 %v480
    %598 = vmatprep.subr.bf16.mxu0 0
    %599 = vmatpush1.bf16.msra.mxu0 %v479
    %600 = vmatprep.subr.bf16.mxu0 0
    %601 = vmatpush1.bf16.msra.mxu0 %v478
    %602 = vmatprep.subr.bf16.mxu0 0
    %603 = vmatpush1.bf16.msra.mxu0 %v477
    %604 = vmatprep.subr.bf16.mxu0 0
    %605 = vmatpush1.bf16.msra.mxu0 %v476
    %606 = vmatprep.subr.bf16.mxu0 0
    %607 = vmatpush1.bf16.msra.mxu0 %v475
    %608 = vmatprep.subr.bf16.mxu0 0
    %609 = vmatpush1.bf16.msra.mxu0 %v474
    %610 = vmatprep.subr.bf16.mxu0 0
    %611 = vmatpush2.bf16.msra.mxu0 0
    %612 = vmatprep.subr.bf16.mxu0 0
    %613 = vmatpush2.bf16.msra.mxu0 0
    %614 = vmatprep.subr.bf16.mxu0 0
    %615 = vmatpush2.bf16.msra.mxu0 0
    %616 = vmatprep.subr.bf16.mxu0 0
    %617 = vmatpush2.bf16.msra.mxu0 0
    %618 = vmatprep.subr.bf16.mxu0 0
    %619 = vmatpush2.bf16.msra.mxu0 0
    %620 = vmatprep.subr.bf16.mxu0 0
    %621 = vmatpush2.bf16.msra.mxu0 0
    %622 = vmatprep.subr.bf16.mxu0 0
    %623 = vmatpush2.bf16.msra.mxu0 0
    %624 = vmatprep.subr.bf16.mxu0 0
    %625 = vmatpush2.bf16.msra.mxu0 0
    %626 = vmatprep.mubr.bf16.mxu0 0
    %627 = vmatmul.mubr.bf16.gmra.mxu0 %v578
    %v628 = vpop.f32.mrf.mxu0
    %v629 = vadd.f32 %v484, %v628
    %v630 = vpop.f32.mrf.mxu0
    %v631 = vpop.f32.mrf.mxu0
    %v632 = vadd.f32 %v488, %v631
    %v633 = vpop.f32.mrf.mxu0
    %634 = vmatprep.mubr.bf16.mxu0 0
    %635 = vmatmul.mubr.bf16.gmra.mxu0 %v579
    %v636 = vpop.f32.mrf.mxu0
    %v637 = vadd.f32 %v492, %v636
    %v638 = vpop.f32.mrf.mxu0
    %v639 = vpop.f32.mrf.mxu0
    %v640 = vadd.f32 %v496, %v639
    %v641 = vpop.f32.mrf.mxu0
    %642 = vmatprep.mubr.bf16.mxu0 0
    %643 = vmatmul.mubr.bf16.gmra.mxu0 %v580
    %v644 = vpop.f32.mrf.mxu0
    %v645 = vadd.f32 %v500, %v644
    %v646 = vpop.f32.mrf.mxu0
    %v647 = vpop.f32.mrf.mxu0
    %v648 = vadd.f32 %v504, %v647
    %v649 = vpop.f32.mrf.mxu0
    %650 = vmatprep.mubr.bf16.mxu0 0
    %651 = vmatmul.mubr.bf16.gmra.mxu0 %v581
    %v652 = vpop.f32.mrf.mxu0
    %v653 = vadd.f32 %v508, %v652
    %v654 = vpop.f32.mrf.mxu0
    %v655 = vpop.f32.mrf.mxu0
    %v656 = vadd.f32 %v512, %v655
    %v657 = vpop.f32.mrf.mxu0
    %658 = vmatprep.mubr.bf16.mxu0 0
    %659 = vmatmul.mubr.bf16.gmra.mxu0 %v582
    %v660 = vpop.f32.mrf.mxu0
    %v661 = vadd.f32 %v516, %v660
    %v662 = vpop.f32.mrf.mxu0
    %v663 = vpop.f32.mrf.mxu0
    %v664 = vadd.f32 %v520, %v663
    %v665 = vpop.f32.mrf.mxu0
    %666 = vmatprep.mubr.bf16.mxu0 0
    %667 = vmatmul.mubr.bf16.gmra.mxu0 %v583
    %v668 = vpop.f32.mrf.mxu0
    %v669 = vadd.f32 %v524, %v668
    %v670 = vpop.f32.mrf.mxu0
    %v671 = vpop.f32.mrf.mxu0
    %v672 = vadd.f32 %v528, %v671
    %v673 = vpop.f32.mrf.mxu0
    %674 = vmatprep.mubr.bf16.mxu0 0
    %675 = vmatmul.mubr.bf16.gmra.mxu0 %v584
    %v676 = vpop.f32.mrf.mxu0
    %v677 = vadd.f32 %v532, %v676
    %v678 = vpop.f32.mrf.mxu0
    %v679 = vpop.f32.mrf.mxu0
    %v680 = vadd.f32 %v536, %v679
    %v681 = vpop.f32.mrf.mxu0
    %682 = vmatprep.mubr.bf16.mxu0 0
    %683 = vmatmul.mubr.bf16.gmra.mxu0 %v585
    %v684 = vpop.f32.mrf.mxu0
    %v685 = vadd.f32 %v540, %v684
    %v686 = vpop.f32.mrf.mxu0
    %v687 = vpop.f32.mrf.mxu0
    %v688 = vadd.f32 %v544, %v687
    %v689 = vpop.f32.mrf.mxu0
    %690 = vdwg.mxu0
    %v691 = vsub.f32 0.0, %v629
    %v692 = vsub.f32 0.0, %v632
    %v693 = vsub.f32 0.0, %v637
    %v694 = vsub.f32 0.0, %v640
    %v695 = vsub.f32 0.0, %v645
    %v696 = vsub.f32 0.0, %v648
    %v697 = vsub.f32 0.0, %v653
    %v698 = vsub.f32 0.0, %v656
    %v699 = vsub.f32 0.0, %v661
    %v700 = vsub.f32 0.0, %v664
    %v701 = vsub.f32 0.0, %v669
    %v702 = vsub.f32 0.0, %v672
    %v703 = vsub.f32 0.0, %v677
    %v704 = vsub.f32 0.0, %v680
    %v705 = vsub.f32 0.0, %v685
    %v706 = vsub.f32 0.0, %v688
    %v707 = vmul.f32 %v691, 1.442695
    %v708 = vpow.pop %v707
    %v709 = vmul.f32 %v692, 1.442695
    %v710 = vpow.pop %v709
    %v711 = vmul.f32 %v693, 1.442695
    %v712 = vpow.pop %v711
    %v713 = vmul.f32 %v694, 1.442695
    %v714 = vpow.pop %v713
    %v715 = vmul.f32 %v695, 1.442695
    %v716 = vpow.pop %v715
    %v717 = vmul.f32 %v696, 1.442695
    %v718 = vpow.pop %v717
    %v719 = vmul.f32 %v697, 1.442695
    %v720 = vpow.pop %v719
    %v721 = vmul.f32 %v698, 1.442695
    %v722 = vpow.pop %v721
    %v723 = vmul.f32 %v699, 1.442695
    %v724 = vpow.pop %v723
    %v725 = vmul.f32 %v700, 1.442695
    %v726 = vpow.pop %v725
    %v727 = vmul.f32 %v701, 1.442695
    %v728 = vpow.pop %v727
    %v729 = vmul.f32 %v702, 1.442695
    %v730 = vpow.pop %v729
    %v731 = vmul.f32 %v703, 1.442695
    %v732 = vpow.pop %v731
    %v733 = vmul.f32 %v704, 1.442695
    %v734 = vpow.pop %v733
    %v735 = vmul.f32 %v705, 1.442695
    %v736 = vpow.pop %v735
    %v737 = vmul.f32 %v706, 1.442695
    %v738 = vpow.pop %v737
    %v739 = vadd.f32 %v708, 1.0
    %v740 = vadd.f32 %v710, 1.0
    %v741 = vadd.f32 %v712, 1.0
    %v742 = vadd.f32 %v714, 1.0
    %v743 = vadd.f32 %v716, 1.0
    %v744 = vadd.f32 %v718, 1.0
    %v745 = vadd.f32 %v720, 1.0
    %v746 = vadd.f32 %v722, 1.0
    %v747 = vadd.f32 %v724, 1.0
    %v748 = vadd.f32 %v726, 1.0
    %v749 = vadd.f32 %v728, 1.0
    %v750 = vadd.f32 %v730, 1.0
    %v751 = vadd.f32 %v732, 1.0
    %v752 = vadd.f32 %v734, 1.0
    %v753 = vadd.f32 %v736, 1.0
    %v754 = vadd.f32 %v738, 1.0
    %v755 = vrcp.pop %v739
    %v756 = vrcp.pop %v740
    %v757 = vrcp.pop %v741
    %v758 = vrcp.pop %v742
    %v759 = vrcp.pop %v743
    %v760 = vrcp.pop %v744
    %v761 = vrcp.pop %v745
    %v762 = vrcp.pop %v746
    %v763 = vrcp.pop %v747
    %v764 = vrcp.pop %v748
    %v765 = vrcp.pop %v749
    %v766 = vrcp.pop %v750
    %v767 = vrcp.pop %v751
    %v768 = vrcp.pop %v752
    %v769 = vrcp.pop %v753
    %v770 = vrcp.pop %v754
    %v771 = vmul.f32 %v629, %v755
    %v772 = vmul.f32 %v632, %v756
    %v773 = vmul.f32 %v637, %v757
    %v774 = vmul.f32 %v640, %v758
    %v775 = vmul.f32 %v645, %v759
    %v776 = vmul.f32 %v648, %v760
    %v777 = vmul.f32 %v653, %v761
    %v778 = vmul.f32 %v656, %v762
    %v779 = vmul.f32 %v661, %v763
    %v780 = vmul.f32 %v664, %v764
    %v781 = vmul.f32 %v669, %v765
    %v782 = vmul.f32 %v672, %v766
    %v783 = vmul.f32 %v677, %v767
    %v784 = vmul.f32 %v680, %v768
    %v785 = vmul.f32 %v685, %v769
    %v786 = vmul.f32 %v688, %v770
    %s787 = scalar_lea.vmem [#allocation2], 64
    %v788 = vld [vmem:[%s787] sm:$0xf]
    %v789 = vld [vmem:[%s787 + $0x4] sm:$0xf]
    %v790 = vld [vmem:[%s787 + $0x8] sm:$0xf]
    %v791 = vld [vmem:[%s787 + $0xc] sm:$0xf]
    %v792 = vld [vmem:[%s787 + $0x10] sm:$0xf]
    %v793 = vld [vmem:[%s787 + $0x14] sm:$0xf]
    %v794 = vld [vmem:[%s787 + $0x18] sm:$0xf]
    %v795 = vld [vmem:[%s787 + $0x1c] sm:$0xf]
    %v796 = vld [vmem:[%s787 + $0x20] sm:$0xf]
    %v797 = vld [vmem:[%s787 + $0x24] sm:$0xf]
    %v798 = vld [vmem:[%s787 + $0x28] sm:$0xf]
    %v799 = vld [vmem:[%s787 + $0x2c] sm:$0xf]
    %v800 = vld [vmem:[%s787 + $0x30] sm:$0xf]
    %v801 = vld [vmem:[%s787 + $0x34] sm:$0xf]
    %v802 = vld [vmem:[%s787 + $0x38] sm:$0xf]
    %v803 = vld [vmem:[%s787 + $0x3c] sm:$0xf]
    %v804 = vpack.c.bf16 %v772, %v771
    %v805 = vpack.c.bf16 %v774, %v773
    %v806 = vpack.c.bf16 %v776, %v775
    %v807 = vpack.c.bf16 %v778, %v777
    %v808 = vpack.c.bf16 %v780, %v779
    %v809 = vpack.c.bf16 %v782, %v781
    %v810 = vpack.c.bf16 %v784, %v783
    %v811 = vpack.c.bf16 %v786, %v785
    %812 = vset.pattern.permute.xlu0 2
    %813 = vperm.xlu0 %812, %v50
    %v814 = vpop.permute.xlu0 %813
    %816 = vset.pattern.permute.xlu0 2
    %817 = vperm.xlu0 %816, %v51
    %v818 = vpop.permute.xlu0 %817
    %820 = vset.pattern.permute.xlu0 2
    %821 = vperm.xlu0 %820, %v52
    %v822 = vpop.permute.xlu0 %821
    %824 = vset.pattern.permute.xlu0 2
    %825 = vperm.xlu0 %824, %v53
    %v826 = vpop.permute.xlu0 %825
    %828 = vset.pattern.permute.xlu0 2
    %829 = vperm.xlu0 %828, %v54
    %v830 = vpop.permute.xlu0 %829
    %832 = vset.pattern.permute.xlu0 2
    %833 = vperm.xlu0 %832, %v55
    %v834 = vpop.permute.xlu0 %833
    %836 = vset.pattern.permute.xlu0 2
    %837 = vperm.xlu0 %836, %v56
    %v838 = vpop.permute.xlu0 %837
    %840 = vset.pattern.permute.xlu0 2
    %841 = vperm.xlu0 %840, %v57
    %v842 = vpop.permute.xlu0 %841
    %844 = vset.pattern.permute.xlu0 2
    %845 = vperm.xlu0 %844, %v58
    %v846 = vpop.permute.xlu0 %845
    %848 = vset.pattern.permute.xlu0 2
    %849 = vperm.xlu0 %848, %v59
    %v850 = vpop.permute.xlu0 %849
    %852 = vset.pattern.permute.xlu0 2
    %853 = vperm.xlu0 %852, %v60
    %v854 = vpop.permute.xlu0 %853
    %856 = vset.pattern.permute.xlu0 2
    %857 = vperm.xlu0 %856, %v61
    %v858 = vpop.permute.xlu0 %857
    %860 = vset.pattern.permute.xlu0 2
    %861 = vperm.xlu0 %860, %v62
    %v862 = vpop.permute.xlu0 %861
    %864 = vset.pattern.permute.xlu0 2
    %865 = vperm.xlu0 %864, %v63
    %v866 = vpop.permute.xlu0 %865
    %868 = vset.pattern.permute.xlu0 2
    %869 = vperm.xlu0 %868, %v64
    %v870 = vpop.permute.xlu0 %869
    %872 = vset.pattern.permute.xlu0 2
    %873 = vperm.xlu0 %872, %v65
    %v874 = vpop.permute.xlu0 %873
    %v892 = vunpack.c.l.b16 %v788
    %v893 = vunpack.c.l.b16 %v789
    %v894 = vunpack.c.l.b16 %v790
    %v895 = vunpack.c.l.b16 %v791
    %v896 = vunpack.c.l.b16 %v792
    %v897 = vunpack.c.l.b16 %v793
    %v898 = vunpack.c.l.b16 %v794
    %v899 = vunpack.c.l.b16 %v795
    %v900 = vunpack.c.l.b16 %v796
    %v901 = vunpack.c.l.b16 %v797
    %v902 = vunpack.c.l.b16 %v798
    %v903 = vunpack.c.l.b16 %v799
    %v904 = vunpack.c.l.b16 %v800
    %v905 = vunpack.c.l.b16 %v801
    %v906 = vunpack.c.l.b16 %v802
    %v907 = vunpack.c.l.b16 %v803
    %v908 = vpack.c.b16 %v893, %v892
    %v909 = vpack.c.b16 %v895, %v894
    %v910 = vpack.c.b16 %v897, %v896
    %v911 = vpack.c.b16 %v899, %v898
    %v912 = vpack.c.b16 %v901, %v900
    %v913 = vpack.c.b16 %v903, %v902
    %v914 = vpack.c.b16 %v905, %v904
    %v915 = vpack.c.b16 %v907, %v906
    %924 = vmatprep.subr.bf16.mxu0 0
    %925 = vmatpush1.bf16.msra.mxu0 %v811
    %926 = vmatprep.subr.bf16.mxu0 0
    %927 = vmatpush1.bf16.msra.mxu0 %v810
    %928 = vmatprep.subr.bf16.mxu0 0
    %929 = vmatpush1.bf16.msra.mxu0 %v809
    %930 = vmatprep.subr.bf16.mxu0 0
    %931 = vmatpush1.bf16.msra.mxu0 %v808
    %932 = vmatprep.subr.bf16.mxu0 0
    %933 = vmatpush1.bf16.msra.mxu0 %v807
    %934 = vmatprep.subr.bf16.mxu0 0
    %935 = vmatpush1.bf16.msra.mxu0 %v806
    %936 = vmatprep.subr.bf16.mxu0 0
    %937 = vmatpush1.bf16.msra.mxu0 %v805
    %938 = vmatprep.subr.bf16.mxu0 0
    %939 = vmatpush1.bf16.msra.mxu0 %v804
    %940 = vmatprep.subr.bf16.mxu0 0
    %941 = vmatpush2.bf16.msra.mxu0 0
    %942 = vmatprep.subr.bf16.mxu0 0
    %943 = vmatpush2.bf16.msra.mxu0 0
    %944 = vmatprep.subr.bf16.mxu0 0
    %945 = vmatpush2.bf16.msra.mxu0 0
    %946 = vmatprep.subr.bf16.mxu0 0
    %947 = vmatpush2.bf16.msra.mxu0 0
    %948 = vmatprep.subr.bf16.mxu0 0
    %949 = vmatpush2.bf16.msra.mxu0 0
    %950 = vmatprep.subr.bf16.mxu0 0
    %951 = vmatpush2.bf16.msra.mxu0 0
    %952 = vmatprep.subr.bf16.mxu0 0
    %953 = vmatpush2.bf16.msra.mxu0 0
    %954 = vmatprep.subr.bf16.mxu0 0
    %955 = vmatpush2.bf16.msra.mxu0 0
    %956 = vmatprep.mubr.bf16.mxu0 0
    %957 = vmatmul.mubr.bf16.gmra.mxu0 %v908
    %v958 = vpop.f32.mrf.mxu0
    %v959 = vadd.f32 %v814, %v958
    %v960 = vpop.f32.mrf.mxu0
    %v961 = vpop.f32.mrf.mxu0
    %v962 = vadd.f32 %v818, %v961
    %v963 = vpop.f32.mrf.mxu0
    %964 = vmatprep.mubr.bf16.mxu0 0
    %965 = vmatmul.mubr.bf16.gmra.mxu0 %v909
    %v966 = vpop.f32.mrf.mxu0
    %v967 = vadd.f32 %v822, %v966
    %v968 = vpop.f32.mrf.mxu0
    %v969 = vpop.f32.mrf.mxu0
    %v970 = vadd.f32 %v826, %v969
    %v971 = vpop.f32.mrf.mxu0
    %972 = vmatprep.mubr.bf16.mxu0 0
    %973 = vmatmul.mubr.bf16.gmra.mxu0 %v910
    %v974 = vpop.f32.mrf.mxu0
    %v975 = vadd.f32 %v830, %v974
    %v976 = vpop.f32.mrf.mxu0
    %v977 = vpop.f32.mrf.mxu0
    %v978 = vadd.f32 %v834, %v977
    %v979 = vpop.f32.mrf.mxu0
    %980 = vmatprep.mubr.bf16.mxu0 0
    %981 = vmatmul.mubr.bf16.gmra.mxu0 %v911
    %v982 = vpop.f32.mrf.mxu0
    %v983 = vadd.f32 %v838, %v982
    %v984 = vpop.f32.mrf.mxu0
    %v985 = vpop.f32.mrf.mxu0
    %v986 = vadd.f32 %v842, %v985
    %v987 = vpop.f32.mrf.mxu0
    %988 = vmatprep.mubr.bf16.mxu0 0
    %989 = vmatmul.mubr.bf16.gmra.mxu0 %v912
    %v990 = vpop.f32.mrf.mxu0
    %v991 = vadd.f32 %v846, %v990
    %v992 = vpop.f32.mrf.mxu0
    %v993 = vpop.f32.mrf.mxu0
    %v994 = vadd.f32 %v850, %v993
    %v995 = vpop.f32.mrf.mxu0
    %996 = vmatprep.mubr.bf16.mxu0 0
    %997 = vmatmul.mubr.bf16.gmra.mxu0 %v913
    %v998 = vpop.f32.mrf.mxu0
    %v999 = vadd.f32 %v854, %v998
    %v1000 = vpop.f32.mrf.mxu0
    %v1001 = vpop.f32.mrf.mxu0
    %v1002 = vadd.f32 %v858, %v1001
    %v1003 = vpop.f32.mrf.mxu0
    %1004 = vmatprep.mubr.bf16.mxu0 0
    %1005 = vmatmul.mubr.bf16.gmra.mxu0 %v914
    %v1006 = vpop.f32.mrf.mxu0
    %v1007 = vadd.f32 %v862, %v1006
    %v1008 = vpop.f32.mrf.mxu0
    %v1009 = vpop.f32.mrf.mxu0
    %v1010 = vadd.f32 %v866, %v1009
    %v1011 = vpop.f32.mrf.mxu0
    %1012 = vmatprep.mubr.bf16.mxu0 0
    %1013 = vmatmul.mubr.bf16.gmra.mxu0 %v915
    %v1014 = vpop.f32.mrf.mxu0
    %v1015 = vadd.f32 %v870, %v1014
    %v1016 = vpop.f32.mrf.mxu0
    %v1017 = vpop.f32.mrf.mxu0
    %v1018 = vadd.f32 %v874, %v1017
    %v1019 = vpop.f32.mrf.mxu0
    %1020 = vdwg.mxu0
    %v1021 = vsub.f32 0.0, %v959
    %v1022 = vsub.f32 0.0, %v962
    %v1023 = vsub.f32 0.0, %v967
    %v1024 = vsub.f32 0.0, %v970
    %v1025 = vsub.f32 0.0, %v975
    %v1026 = vsub.f32 0.0, %v978
    %v1027 = vsub.f32 0.0, %v983
    %v1028 = vsub.f32 0.0, %v986
    %v1029 = vsub.f32 0.0, %v991
    %v1030 = vsub.f32 0.0, %v994
    %v1031 = vsub.f32 0.0, %v999
    %v1032 = vsub.f32 0.0, %v1002
    %v1033 = vsub.f32 0.0, %v1007
    %v1034 = vsub.f32 0.0, %v1010
    %v1035 = vsub.f32 0.0, %v1015
    %v1036 = vsub.f32 0.0, %v1018
    %v1037 = vmul.f32 %v1021, 1.442695
    %v1038 = vpow.pop %v1037
    %v1039 = vmul.f32 %v1022, 1.442695
    %v1040 = vpow.pop %v1039
    %v1041 = vmul.f32 %v1023, 1.442695
    %v1042 = vpow.pop %v1041
    %v1043 = vmul.f32 %v1024, 1.442695
    %v1044 = vpow.pop %v1043
    %v1045 = vmul.f32 %v1025, 1.442695
    %v1046 = vpow.pop %v1045
    %v1047 = vmul.f32 %v1026, 1.442695
    %v1048 = vpow.pop %v1047
    %v1049 = vmul.f32 %v1027, 1.442695
    %v1050 = vpow.pop %v1049
    %v1051 = vmul.f32 %v1028, 1.442695
    %v1052 = vpow.pop %v1051
    %v1053 = vmul.f32 %v1029, 1.442695
    %v1054 = vpow.pop %v1053
    %v1055 = vmul.f32 %v1030, 1.442695
    %v1056 = vpow.pop %v1055
    %v1057 = vmul.f32 %v1031, 1.442695
    %v1058 = vpow.pop %v1057
    %v1059 = vmul.f32 %v1032, 1.442695
    %v1060 = vpow.pop %v1059
    %v1061 = vmul.f32 %v1033, 1.442695
    %v1062 = vpow.pop %v1061
    %v1063 = vmul.f32 %v1034, 1.442695
    %v1064 = vpow.pop %v1063
    %v1065 = vmul.f32 %v1035, 1.442695
    %v1066 = vpow.pop %v1065
    %v1067 = vmul.f32 %v1036, 1.442695
    %v1068 = vpow.pop %v1067
    %v1069 = vadd.f32 %v1038, 1.0
    %v1070 = vadd.f32 %v1040, 1.0
    %v1071 = vadd.f32 %v1042, 1.0
    %v1072 = vadd.f32 %v1044, 1.0
    %v1073 = vadd.f32 %v1046, 1.0
    %v1074 = vadd.f32 %v1048, 1.0
    %v1075 = vadd.f32 %v1050, 1.0
    %v1076 = vadd.f32 %v1052, 1.0
    %v1077 = vadd.f32 %v1054, 1.0
    %v1078 = vadd.f32 %v1056, 1.0
    %v1079 = vadd.f32 %v1058, 1.0
    %v1080 = vadd.f32 %v1060, 1.0
    %v1081 = vadd.f32 %v1062, 1.0
    %v1082 = vadd.f32 %v1064, 1.0
    %v1083 = vadd.f32 %v1066, 1.0
    %v1084 = vadd.f32 %v1068, 1.0
    %v1085 = vrcp.pop %v1069
    %v1086 = vrcp.pop %v1070
    %v1087 = vrcp.pop %v1071
    %v1088 = vrcp.pop %v1072
    %v1089 = vrcp.pop %v1073
    %v1090 = vrcp.pop %v1074
    %v1091 = vrcp.pop %v1075
    %v1092 = vrcp.pop %v1076
    %v1093 = vrcp.pop %v1077
    %v1094 = vrcp.pop %v1078
    %v1095 = vrcp.pop %v1079
    %v1096 = vrcp.pop %v1080
    %v1097 = vrcp.pop %v1081
    %v1098 = vrcp.pop %v1082
    %v1099 = vrcp.pop %v1083
    %v1100 = vrcp.pop %v1084
    %v1101 = vmul.f32 %v959, %v1085
    %v1102 = vmul.f32 %v962, %v1086
    %v1103 = vmul.f32 %v967, %v1087
    %v1104 = vmul.f32 %v970, %v1088
    %v1105 = vmul.f32 %v975, %v1089
    %v1106 = vmul.f32 %v978, %v1090
    %v1107 = vmul.f32 %v983, %v1091
    %v1108 = vmul.f32 %v986, %v1092
    %v1109 = vmul.f32 %v991, %v1093
    %v1110 = vmul.f32 %v994, %v1094
    %v1111 = vmul.f32 %v999, %v1095
    %v1112 = vmul.f32 %v1002, %v1096
    %v1113 = vmul.f32 %v1007, %v1097
    %v1114 = vmul.f32 %v1010, %v1098
    %v1115 = vmul.f32 %v1015, %v1099
    %v1116 = vmul.f32 %v1018, %v1100
    %s1117 = scalar_lea.vmem [#allocation2], 128
    %v1118 = vld [vmem:[%s1117] sm:$0xf]
    %v1119 = vld [vmem:[%s1117 + $0x4] sm:$0xf]
    %v1120 = vld [vmem:[%s1117 + $0x8] sm:$0xf]
    %v1121 = vld [vmem:[%s1117 + $0xc] sm:$0xf]
    %v1122 = vld [vmem:[%s1117 + $0x10] sm:$0xf]
    %v1123 = vld [vmem:[%s1117 + $0x14] sm:$0xf]
    %v1124 = vld [vmem:[%s1117 + $0x18] sm:$0xf]
    %v1125 = vld [vmem:[%s1117 + $0x1c] sm:$0xf]
    %v1126 = vld [vmem:[%s1117 + $0x20] sm:$0xf]
    %v1127 = vld [vmem:[%s1117 + $0x24] sm:$0xf]
    %v1128 = vld [vmem:[%s1117 + $0x28] sm:$0xf]
    %v1129 = vld [vmem:[%s1117 + $0x2c] sm:$0xf]
    %v1130 = vld [vmem:[%s1117 + $0x30] sm:$0xf]
    %v1131 = vld [vmem:[%s1117 + $0x34] sm:$0xf]
    %v1132 = vld [vmem:[%s1117 + $0x38] sm:$0xf]
    %v1133 = vld [vmem:[%s1117 + $0x3c] sm:$0xf]
    %v1134 = vpack.c.bf16 %v1102, %v1101
    %v1135 = vpack.c.bf16 %v1104, %v1103
    %v1136 = vpack.c.bf16 %v1106, %v1105
    %v1137 = vpack.c.bf16 %v1108, %v1107
    %v1138 = vpack.c.bf16 %v1110, %v1109
    %v1139 = vpack.c.bf16 %v1112, %v1111
    %v1140 = vpack.c.bf16 %v1114, %v1113
    %v1141 = vpack.c.bf16 %v1116, %v1115
    %1142 = vset.pattern.permute.xlu0 3
    %1143 = vperm.xlu0 %1142, %v50
    %v1144 = vpop.permute.xlu0 %1143
    %1146 = vset.pattern.permute.xlu0 3
    %1147 = vperm.xlu0 %1146, %v51
    %v1148 = vpop.permute.xlu0 %1147
    %1150 = vset.pattern.permute.xlu0 3
    %1151 = vperm.xlu0 %1150, %v52
    %v1152 = vpop.permute.xlu0 %1151
    %1154 = vset.pattern.permute.xlu0 3
    %1155 = vperm.xlu0 %1154, %v53
    %v1156 = vpop.permute.xlu0 %1155
    %1158 = vset.pattern.permute.xlu0 3
    %1159 = vperm.xlu0 %1158, %v54
    %v1160 = vpop.permute.xlu0 %1159
    %1162 = vset.pattern.permute.xlu0 3
    %1163 = vperm.xlu0 %1162, %v55
    %v1164 = vpop.permute.xlu0 %1163
    %1166 = vset.pattern.permute.xlu0 3
    %1167 = vperm.xlu0 %1166, %v56
    %v1168 = vpop.permute.xlu0 %1167
    %1170 = vset.pattern.permute.xlu0 3
    %1171 = vperm.xlu0 %1170, %v57
    %v1172 = vpop.permute.xlu0 %1171
    %1174 = vset.pattern.permute.xlu0 3
    %1175 = vperm.xlu0 %1174, %v58
    %v1176 = vpop.permute.xlu0 %1175
    %1178 = vset.pattern.permute.xlu0 3
    %1179 = vperm.xlu0 %1178, %v59
    %v1180 = vpop.permute.xlu0 %1179
    %1182 = vset.pattern.permute.xlu0 3
    %1183 = vperm.xlu0 %1182, %v60
    %v1184 = vpop.permute.xlu0 %1183
    %1186 = vset.pattern.permute.xlu0 3
    %1187 = vperm.xlu0 %1186, %v61
    %v1188 = vpop.permute.xlu0 %1187
    %1190 = vset.pattern.permute.xlu0 3
    %1191 = vperm.xlu0 %1190, %v62
    %v1192 = vpop.permute.xlu0 %1191
    %1194 = vset.pattern.permute.xlu0 3
    %1195 = vperm.xlu0 %1194, %v63
    %v1196 = vpop.permute.xlu0 %1195
    %1198 = vset.pattern.permute.xlu0 3
    %1199 = vperm.xlu0 %1198, %v64
    %v1200 = vpop.permute.xlu0 %1199
    %1202 = vset.pattern.permute.xlu0 3
    %1203 = vperm.xlu0 %1202, %v65
    %v1204 = vpop.permute.xlu0 %1203
    %v1222 = vunpack.c.l.b16 %v1118
    %v1223 = vunpack.c.l.b16 %v1119
    %v1224 = vunpack.c.l.b16 %v1120
    %v1225 = vunpack.c.l.b16 %v1121
    %v1226 = vunpack.c.l.b16 %v1122
    %v1227 = vunpack.c.l.b16 %v1123
    %v1228 = vunpack.c.l.b16 %v1124
    %v1229 = vunpack.c.l.b16 %v1125
    %v1230 = vunpack.c.l.b16 %v1126
    %v1231 = vunpack.c.l.b16 %v1127
    %v1232 = vunpack.c.l.b16 %v1128
    %v1233 = vunpack.c.l.b16 %v1129
    %v1234 = vunpack.c.l.b16 %v1130
    %v1235 = vunpack.c.l.b16 %v1131
    %v1236 = vunpack.c.l.b16 %v1132
    %v1237 = vunpack.c.l.b16 %v1133
    %v1238 = vpack.c.b16 %v1223, %v1222
    %v1239 = vpack.c.b16 %v1225, %v1224
    %v1240 = vpack.c.b16 %v1227, %v1226
    %v1241 = vpack.c.b16 %v1229, %v1228
    %v1242 = vpack.c.b16 %v1231, %v1230
    %v1243 = vpack.c.b16 %v1233, %v1232
    %v1244 = vpack.c.b16 %v1235, %v1234
    %v1245 = vpack.c.b16 %v1237, %v1236
    %1254 = vmatprep.subr.bf16.mxu0 0
    %1255 = vmatpush1.bf16.msra.mxu0 %v1141
    %1256 = vmatprep.subr.bf16.mxu0 0
    %1257 = vmatpush1.bf16.msra.mxu0 %v1140
    %1258 = vmatprep.subr.bf16.mxu0 0
    %1259 = vmatpush1.bf16.msra.mxu0 %v1139
    %1260 = vmatprep.subr.bf16.mxu0 0
    %1261 = vmatpush1.bf16.msra.mxu0 %v1138
    %1262 = vmatprep.subr.bf16.mxu0 0
    %1263 = vmatpush1.bf16.msra.mxu0 %v1137
    %1264 = vmatprep.subr.bf16.mxu0 0
    %1265 = vmatpush1.bf16.msra.mxu0 %v1136
    %1266 = vmatprep.subr.bf16.mxu0 0
    %1267 = vmatpush1.bf16.msra.mxu0 %v1135
    %1268 = vmatprep.subr.bf16.mxu0 0
    %1269 = vmatpush1.bf16.msra.mxu0 %v1134
    %1270 = vmatprep.subr.bf16.mxu0 0
    %1271 = vmatpush2.bf16.msra.mxu0 0
    %1272 = vmatprep.subr.bf16.mxu0 0
    %1273 = vmatpush2.bf16.msra.mxu0 0
    %1274 = vmatprep.subr.bf16.mxu0 0
    %1275 = vmatpush2.bf16.msra.mxu0 0
    %1276 = vmatprep.subr.bf16.mxu0 0
    %1277 = vmatpush2.bf16.msra.mxu0 0
    %1278 = vmatprep.subr.bf16.mxu0 0
    %1279 = vmatpush2.bf16.msra.mxu0 0
    %1280 = vmatprep.subr.bf16.mxu0 0
    %1281 = vmatpush2.bf16.msra.mxu0 0
    %1282 = vmatprep.subr.bf16.mxu0 0
    %1283 = vmatpush2.bf16.msra.mxu0 0
    %1284 = vmatprep.subr.bf16.mxu0 0
    %1285 = vmatpush2.bf16.msra.mxu0 0
    %1286 = vmatprep.mubr.bf16.mxu0 0
    %1287 = vmatmul.mubr.bf16.gmra.mxu0 %v1238
    %v1288 = vpop.f32.mrf.mxu0
    %v1289 = vadd.f32 %v1144, %v1288
    %v1290 = vpop.f32.mrf.mxu0
    %v1291 = vpop.f32.mrf.mxu0
    %v1292 = vadd.f32 %v1148, %v1291
    %v1293 = vpop.f32.mrf.mxu0
    %1294 = vmatprep.mubr.bf16.mxu0 0
    %1295 = vmatmul.mubr.bf16.gmra.mxu0 %v1239
    %v1296 = vpop.f32.mrf.mxu0
    %v1297 = vadd.f32 %v1152, %v1296
    %v1298 = vpop.f32.mrf.mxu0
    %v1299 = vpop.f32.mrf.mxu0
    %v1300 = vadd.f32 %v1156, %v1299
    %v1301 = vpop.f32.mrf.mxu0
    %1302 = vmatprep.mubr.bf16.mxu0 0
    %1303 = vmatmul.mubr.bf16.gmra.mxu0 %v1240
    %v1304 = vpop.f32.mrf.mxu0
    %v1305 = vadd.f32 %v1160, %v1304
    %v1306 = vpop.f32.mrf.mxu0
    %v1307 = vpop.f32.mrf.mxu0
    %v1308 = vadd.f32 %v1164, %v1307
    %v1309 = vpop.f32.mrf.mxu0
    %1310 = vmatprep.mubr.bf16.mxu0 0
    %1311 = vmatmul.mubr.bf16.gmra.mxu0 %v1241
    %v1312 = vpop.f32.mrf.mxu0
    %v1313 = vadd.f32 %v1168, %v1312
    %v1314 = vpop.f32.mrf.mxu0
    %v1315 = vpop.f32.mrf.mxu0
    %v1316 = vadd.f32 %v1172, %v1315
    %v1317 = vpop.f32.mrf.mxu0
    %1318 = vmatprep.mubr.bf16.mxu0 0
    %1319 = vmatmul.mubr.bf16.gmra.mxu0 %v1242
    %v1320 = vpop.f32.mrf.mxu0
    %v1321 = vadd.f32 %v1176, %v1320
    %v1322 = vpop.f32.mrf.mxu0
    %v1323 = vpop.f32.mrf.mxu0
    %v1324 = vadd.f32 %v1180, %v1323
    %v1325 = vpop.f32.mrf.mxu0
    %1326 = vmatprep.mubr.bf16.mxu0 0
    %1327 = vmatmul.mubr.bf16.gmra.mxu0 %v1243
    %v1328 = vpop.f32.mrf.mxu0
    %v1329 = vadd.f32 %v1184, %v1328
    %v1330 = vpop.f32.mrf.mxu0
    %v1331 = vpop.f32.mrf.mxu0
    %v1332 = vadd.f32 %v1188, %v1331
    %v1333 = vpop.f32.mrf.mxu0
    %1334 = vmatprep.mubr.bf16.mxu0 0
    %1335 = vmatmul.mubr.bf16.gmra.mxu0 %v1244
    %v1336 = vpop.f32.mrf.mxu0
    %v1337 = vadd.f32 %v1192, %v1336
    %v1338 = vpop.f32.mrf.mxu0
    %v1339 = vpop.f32.mrf.mxu0
    %v1340 = vadd.f32 %v1196, %v1339
    %v1341 = vpop.f32.mrf.mxu0
    %1342 = vmatprep.mubr.bf16.mxu0 0
    %1343 = vmatmul.mubr.bf16.gmra.mxu0 %v1245
    %v1344 = vpop.f32.mrf.mxu0
    %v1345 = vadd.f32 %v1200, %v1344
    %v1346 = vpop.f32.mrf.mxu0
    %v1347 = vpop.f32.mrf.mxu0
    %v1348 = vadd.f32 %v1204, %v1347
    %v1349 = vpop.f32.mrf.mxu0
    %1350 = vdwg.mxu0
    %v1351 = vsub.f32 0.0, %v1289
    %v1352 = vsub.f32 0.0, %v1292
    %v1353 = vsub.f32 0.0, %v1297
    %v1354 = vsub.f32 0.0, %v1300
    %v1355 = vsub.f32 0.0, %v1305
    %v1356 = vsub.f32 0.0, %v1308
    %v1357 = vsub.f32 0.0, %v1313
    %v1358 = vsub.f32 0.0, %v1316
    %v1359 = vsub.f32 0.0, %v1321
    %v1360 = vsub.f32 0.0, %v1324
    %v1361 = vsub.f32 0.0, %v1329
    %v1362 = vsub.f32 0.0, %v1332
    %v1363 = vsub.f32 0.0, %v1337
    %v1364 = vsub.f32 0.0, %v1340
    %v1365 = vsub.f32 0.0, %v1345
    %v1366 = vsub.f32 0.0, %v1348
    %v1367 = vmul.f32 %v1351, 1.442695
    %v1368 = vpow.pop %v1367
    %v1369 = vmul.f32 %v1352, 1.442695
    %v1370 = vpow.pop %v1369
    %v1371 = vmul.f32 %v1353, 1.442695
    %v1372 = vpow.pop %v1371
    %v1373 = vmul.f32 %v1354, 1.442695
    %v1374 = vpow.pop %v1373
    %v1375 = vmul.f32 %v1355, 1.442695
    %v1376 = vpow.pop %v1375
    %v1377 = vmul.f32 %v1356, 1.442695
    %v1378 = vpow.pop %v1377
    %v1379 = vmul.f32 %v1357, 1.442695
    %v1380 = vpow.pop %v1379
    %v1381 = vmul.f32 %v1358, 1.442695
    %v1382 = vpow.pop %v1381
    %v1383 = vmul.f32 %v1359, 1.442695
    %v1384 = vpow.pop %v1383
    %v1385 = vmul.f32 %v1360, 1.442695
    %v1386 = vpow.pop %v1385
    %v1387 = vmul.f32 %v1361, 1.442695
    %v1388 = vpow.pop %v1387
    %v1389 = vmul.f32 %v1362, 1.442695
    %v1390 = vpow.pop %v1389
    %v1391 = vmul.f32 %v1363, 1.442695
    %v1392 = vpow.pop %v1391
    %v1393 = vmul.f32 %v1364, 1.442695
    %v1394 = vpow.pop %v1393
    %v1395 = vmul.f32 %v1365, 1.442695
    %v1396 = vpow.pop %v1395
    %v1397 = vmul.f32 %v1366, 1.442695
    %v1398 = vpow.pop %v1397
    %v1399 = vadd.f32 %v1368, 1.0
    %v1400 = vadd.f32 %v1370, 1.0
    %v1401 = vadd.f32 %v1372, 1.0
    %v1402 = vadd.f32 %v1374, 1.0
    %v1403 = vadd.f32 %v1376, 1.0
    %v1404 = vadd.f32 %v1378, 1.0
    %v1405 = vadd.f32 %v1380, 1.0
    %v1406 = vadd.f32 %v1382, 1.0
    %v1407 = vadd.f32 %v1384, 1.0
    %v1408 = vadd.f32 %v1386, 1.0
    %v1409 = vadd.f32 %v1388, 1.0
    %v1410 = vadd.f32 %v1390, 1.0
    %v1411 = vadd.f32 %v1392, 1.0
    %v1412 = vadd.f32 %v1394, 1.0
    %v1413 = vadd.f32 %v1396, 1.0
    %v1414 = vadd.f32 %v1398, 1.0
    %v1415 = vrcp.pop %v1399
    %v1416 = vrcp.pop %v1400
    %v1417 = vrcp.pop %v1401
    %v1418 = vrcp.pop %v1402
    %v1419 = vrcp.pop %v1403
    %v1420 = vrcp.pop %v1404
    %v1421 = vrcp.pop %v1405
    %v1422 = vrcp.pop %v1406
    %v1423 = vrcp.pop %v1407
    %v1424 = vrcp.pop %v1408
    %v1425 = vrcp.pop %v1409
    %v1426 = vrcp.pop %v1410
    %v1427 = vrcp.pop %v1411
    %v1428 = vrcp.pop %v1412
    %v1429 = vrcp.pop %v1413
    %v1430 = vrcp.pop %v1414
    %v1431 = vmul.f32 %v1289, %v1415
    %v1432 = vmul.f32 %v1292, %v1416
    %v1433 = vmul.f32 %v1297, %v1417
    %v1434 = vmul.f32 %v1300, %v1418
    %v1435 = vmul.f32 %v1305, %v1419
    %v1436 = vmul.f32 %v1308, %v1420
    %v1437 = vmul.f32 %v1313, %v1421
    %v1438 = vmul.f32 %v1316, %v1422
    %v1439 = vmul.f32 %v1321, %v1423
    %v1440 = vmul.f32 %v1324, %v1424
    %v1441 = vmul.f32 %v1329, %v1425
    %v1442 = vmul.f32 %v1332, %v1426
    %v1443 = vmul.f32 %v1337, %v1427
    %v1444 = vmul.f32 %v1340, %v1428
    %v1445 = vmul.f32 %v1345, %v1429
    %v1446 = vmul.f32 %v1348, %v1430
    %s1447 = scalar_lea.vmem [#allocation2], 192
    %v1448 = vld [vmem:[%s1447] sm:$0xf]
    %v1449 = vld [vmem:[%s1447 + $0x4] sm:$0xf]
    %v1450 = vld [vmem:[%s1447 + $0x8] sm:$0xf]
    %v1451 = vld [vmem:[%s1447 + $0xc] sm:$0xf]
    %v1452 = vld [vmem:[%s1447 + $0x10] sm:$0xf]
    %v1453 = vld [vmem:[%s1447 + $0x14] sm:$0xf]
    %v1454 = vld [vmem:[%s1447 + $0x18] sm:$0xf]
    %v1455 = vld [vmem:[%s1447 + $0x1c] sm:$0xf]
    %v1456 = vld [vmem:[%s1447 + $0x20] sm:$0xf]
    %v1457 = vld [vmem:[%s1447 + $0x24] sm:$0xf]
    %v1458 = vld [vmem:[%s1447 + $0x28] sm:$0xf]
    %v1459 = vld [vmem:[%s1447 + $0x2c] sm:$0xf]
    %v1460 = vld [vmem:[%s1447 + $0x30] sm:$0xf]
    %v1461 = vld [vmem:[%s1447 + $0x34] sm:$0xf]
    %v1462 = vld [vmem:[%s1447 + $0x38] sm:$0xf]
    %v1463 = vld [vmem:[%s1447 + $0x3c] sm:$0xf]
    %v1464 = vpack.c.bf16 %v1432, %v1431
    %v1465 = vpack.c.bf16 %v1434, %v1433
    %v1466 = vpack.c.bf16 %v1436, %v1435
    %v1467 = vpack.c.bf16 %v1438, %v1437
    %v1468 = vpack.c.bf16 %v1440, %v1439
    %v1469 = vpack.c.bf16 %v1442, %v1441
    %v1470 = vpack.c.bf16 %v1444, %v1443
    %v1471 = vpack.c.bf16 %v1446, %v1445
    %1472 = vset.pattern.permute.xlu0 4
    %1473 = vperm.xlu0 %1472, %v50
    %v1474 = vpop.permute.xlu0 %1473
    %1476 = vset.pattern.permute.xlu0 4
    %1477 = vperm.xlu0 %1476, %v51
    %v1478 = vpop.permute.xlu0 %1477
    %1480 = vset.pattern.permute.xlu0 4
    %1481 = vperm.xlu0 %1480, %v52
    %v1482 = vpop.permute.xlu0 %1481
    %1484 = vset.pattern.permute.xlu0 4
    %1485 = vperm.xlu0 %1484, %v53
    %v1486 = vpop.permute.xlu0 %1485
    %1488 = vset.pattern.permute.xlu0 4
    %1489 = vperm.xlu0 %1488, %v54
    %v1490 = vpop.permute.xlu0 %1489
    %1492 = vset.pattern.permute.xlu0 4
    %1493 = vperm.xlu0 %1492, %v55
    %v1494 = vpop.permute.xlu0 %1493
    %1496 = vset.pattern.permute.xlu0 4
    %1497 = vperm.xlu0 %1496, %v56
    %v1498 = vpop.permute.xlu0 %1497
    %1500 = vset.pattern.permute.xlu0 4
    %1501 = vperm.xlu0 %1500, %v57
    %v1502 = vpop.permute.xlu0 %1501
    %1504 = vset.pattern.permute.xlu0 4
    %1505 = vperm.xlu0 %1504, %v58
    %v1506 = vpop.permute.xlu0 %1505
    %1508 = vset.pattern.permute.xlu0 4
    %1509 = vperm.xlu0 %1508, %v59
    %v1510 = vpop.permute.xlu0 %1509
    %1512 = vset.pattern.permute.xlu0 4
    %1513 = vperm.xlu0 %1512, %v60
    %v1514 = vpop.permute.xlu0 %1513
    %1516 = vset.pattern.permute.xlu0 4
    %1517 = vperm.xlu0 %1516, %v61
    %v1518 = vpop.permute.xlu0 %1517
    %1520 = vset.pattern.permute.xlu0 4
    %1521 = vperm.xlu0 %1520, %v62
    %v1522 = vpop.permute.xlu0 %1521
    %1524 = vset.pattern.permute.xlu0 4
    %1525 = vperm.xlu0 %1524, %v63
    %v1526 = vpop.permute.xlu0 %1525
    %1528 = vset.pattern.permute.xlu0 4
    %1529 = vperm.xlu0 %1528, %v64
    %v1530 = vpop.permute.xlu0 %1529
    %1532 = vset.pattern.permute.xlu0 4
    %1533 = vperm.xlu0 %1532, %v65
    %v1534 = vpop.permute.xlu0 %1533
    %v1552 = vunpack.c.l.b16 %v1448
    %v1553 = vunpack.c.l.b16 %v1449
    %v1554 = vunpack.c.l.b16 %v1450
    %v1555 = vunpack.c.l.b16 %v1451
    %v1556 = vunpack.c.l.b16 %v1452
    %v1557 = vunpack.c.l.b16 %v1453
    %v1558 = vunpack.c.l.b16 %v1454
    %v1559 = vunpack.c.l.b16 %v1455
    %v1560 = vunpack.c.l.b16 %v1456
    %v1561 = vunpack.c.l.b16 %v1457
    %v1562 = vunpack.c.l.b16 %v1458
    %v1563 = vunpack.c.l.b16 %v1459
    %v1564 = vunpack.c.l.b16 %v1460
    %v1565 = vunpack.c.l.b16 %v1461
    %v1566 = vunpack.c.l.b16 %v1462
    %v1567 = vunpack.c.l.b16 %v1463
    %v1568 = vpack.c.b16 %v1553, %v1552
    %v1569 = vpack.c.b16 %v1555, %v1554
    %v1570 = vpack.c.b16 %v1557, %v1556
    %v1571 = vpack.c.b16 %v1559, %v1558
    %v1572 = vpack.c.b16 %v1561, %v1560
    %v1573 = vpack.c.b16 %v1563, %v1562
    %v1574 = vpack.c.b16 %v1565, %v1564
    %v1575 = vpack.c.b16 %v1567, %v1566
    %1584 = vmatprep.subr.bf16.mxu0 0
    %1585 = vmatpush1.bf16.msra.mxu0 %v1471
    %1586 = vmatprep.subr.bf16.mxu0 0
    %1587 = vmatpush1.bf16.msra.mxu0 %v1470
    %1588 = vmatprep.subr.bf16.mxu0 0
    %1589 = vmatpush1.bf16.msra.mxu0 %v1469
    %1590 = vmatprep.subr.bf16.mxu0 0
    %1591 = vmatpush1.bf16.msra.mxu0 %v1468
    %1592 = vmatprep.subr.bf16.mxu0 0
    %1593 = vmatpush1.bf16.msra.mxu0 %v1467
    %1594 = vmatprep.subr.bf16.mxu0 0
    %1595 = vmatpush1.bf16.msra.mxu0 %v1466
    %1596 = vmatprep.subr.bf16.mxu0 0
    %1597 = vmatpush1.bf16.msra.mxu0 %v1465
    %1598 = vmatprep.subr.bf16.mxu0 0
    %1599 = vmatpush1.bf16.msra.mxu0 %v1464
    %1600 = vmatprep.subr.bf16.mxu0 0
    %1601 = vmatpush2.bf16.msra.mxu0 0
    %1602 = vmatprep.subr.bf16.mxu0 0
    %1603 = vmatpush2.bf16.msra.mxu0 0
    %1604 = vmatprep.subr.bf16.mxu0 0
    %1605 = vmatpush2.bf16.msra.mxu0 0
    %1606 = vmatprep.subr.bf16.mxu0 0
    %1607 = vmatpush2.bf16.msra.mxu0 0
    %1608 = vmatprep.subr.bf16.mxu0 0
    %1609 = vmatpush2.bf16.msra.mxu0 0
    %1610 = vmatprep.subr.bf16.mxu0 0
    %1611 = vmatpush2.bf16.msra.mxu0 0
    %1612 = vmatprep.subr.bf16.mxu0 0
    %1613 = vmatpush2.bf16.msra.mxu0 0
    %1614 = vmatprep.subr.bf16.mxu0 0
    %1615 = vmatpush2.bf16.msra.mxu0 0
    %1616 = vmatprep.mubr.bf16.mxu0 0
    %1617 = vmatmul.mubr.bf16.gmra.mxu0 %v1568
    %v1618 = vpop.f32.mrf.mxu0
    %v1619 = vadd.f32 %v1474, %v1618
    %v1620 = vpop.f32.mrf.mxu0
    %v1621 = vpop.f32.mrf.mxu0
    %v1622 = vadd.f32 %v1478, %v1621
    %v1623 = vpop.f32.mrf.mxu0
    %1624 = vmatprep.mubr.bf16.mxu0 0
    %1625 = vmatmul.mubr.bf16.gmra.mxu0 %v1569
    %v1626 = vpop.f32.mrf.mxu0
    %v1627 = vadd.f32 %v1482, %v1626
    %v1628 = vpop.f32.mrf.mxu0
    %v1629 = vpop.f32.mrf.mxu0
    %v1630 = vadd.f32 %v1486, %v1629
    %v1631 = vpop.f32.mrf.mxu0
    %1632 = vmatprep.mubr.bf16.mxu0 0
    %1633 = vmatmul.mubr.bf16.gmra.mxu0 %v1570
    %v1634 = vpop.f32.mrf.mxu0
    %v1635 = vadd.f32 %v1490, %v1634
    %v1636 = vpop.f32.mrf.mxu0
    %v1637 = vpop.f32.mrf.mxu0
    %v1638 = vadd.f32 %v1494, %v1637
    %v1639 = vpop.f32.mrf.mxu0
    %1640 = vmatprep.mubr.bf16.mxu0 0
    %1641 = vmatmul.mubr.bf16.gmra.mxu0 %v1571
    %v1642 = vpop.f32.mrf.mxu0
    %v1643 = vadd.f32 %v1498, %v1642
    %v1644 = vpop.f32.mrf.mxu0
    %v1645 = vpop.f32.mrf.mxu0
    %v1646 = vadd.f32 %v1502, %v1645
    %v1647 = vpop.f32.mrf.mxu0
    %1648 = vmatprep.mubr.bf16.mxu0 0
    %1649 = vmatmul.mubr.bf16.gmra.mxu0 %v1572
    %v1650 = vpop.f32.mrf.mxu0
    %v1651 = vadd.f32 %v1506, %v1650
    %v1652 = vpop.f32.mrf.mxu0
    %v1653 = vpop.f32.mrf.mxu0
    %v1654 = vadd.f32 %v1510, %v1653
    %v1655 = vpop.f32.mrf.mxu0
    %1656 = vmatprep.mubr.bf16.mxu0 0
    %1657 = vmatmul.mubr.bf16.gmra.mxu0 %v1573
    %v1658 = vpop.f32.mrf.mxu0
    %v1659 = vadd.f32 %v1514, %v1658
    %v1660 = vpop.f32.mrf.mxu0
    %v1661 = vpop.f32.mrf.mxu0
    %v1662 = vadd.f32 %v1518, %v1661
    %v1663 = vpop.f32.mrf.mxu0
    %1664 = vmatprep.mubr.bf16.mxu0 0
    %1665 = vmatmul.mubr.bf16.gmra.mxu0 %v1574
    %v1666 = vpop.f32.mrf.mxu0
    %v1667 = vadd.f32 %v1522, %v1666
    %v1668 = vpop.f32.mrf.mxu0
    %v1669 = vpop.f32.mrf.mxu0
    %v1670 = vadd.f32 %v1526, %v1669
    %v1671 = vpop.f32.mrf.mxu0
    %1672 = vmatprep.mubr.bf16.mxu0 0
    %1673 = vmatmul.mubr.bf16.gmra.mxu0 %v1575
    %v1674 = vpop.f32.mrf.mxu0
    %v1675 = vadd.f32 %v1530, %v1674
    %v1676 = vpop.f32.mrf.mxu0
    %v1677 = vpop.f32.mrf.mxu0
    %v1678 = vadd.f32 %v1534, %v1677
    %v1679 = vpop.f32.mrf.mxu0
    %1680 = vdwg.mxu0
    %v1681 = vsub.f32 0.0, %v1619
    %v1682 = vsub.f32 0.0, %v1622
    %v1683 = vsub.f32 0.0, %v1627
    %v1684 = vsub.f32 0.0, %v1630
    %v1685 = vsub.f32 0.0, %v1635
    %v1686 = vsub.f32 0.0, %v1638
    %v1687 = vsub.f32 0.0, %v1643
    %v1688 = vsub.f32 0.0, %v1646
    %v1689 = vsub.f32 0.0, %v1651
    %v1690 = vsub.f32 0.0, %v1654
    %v1691 = vsub.f32 0.0, %v1659
    %v1692 = vsub.f32 0.0, %v1662
    %v1693 = vsub.f32 0.0, %v1667
    %v1694 = vsub.f32 0.0, %v1670
    %v1695 = vsub.f32 0.0, %v1675
    %v1696 = vsub.f32 0.0, %v1678
    %v1697 = vmul.f32 %v1681, 1.442695
    %v1698 = vpow.pop %v1697
    %v1699 = vmul.f32 %v1682, 1.442695
    %v1700 = vpow.pop %v1699
    %v1701 = vmul.f32 %v1683, 1.442695
    %v1702 = vpow.pop %v1701
    %v1703 = vmul.f32 %v1684, 1.442695
    %v1704 = vpow.pop %v1703
    %v1705 = vmul.f32 %v1685, 1.442695
    %v1706 = vpow.pop %v1705
    %v1707 = vmul.f32 %v1686, 1.442695
    %v1708 = vpow.pop %v1707
    %v1709 = vmul.f32 %v1687, 1.442695
    %v1710 = vpow.pop %v1709
    %v1711 = vmul.f32 %v1688, 1.442695
    %v1712 = vpow.pop %v1711
    %v1713 = vmul.f32 %v1689, 1.442695
    %v1714 = vpow.pop %v1713
    %v1715 = vmul.f32 %v1690, 1.442695
    %v1716 = vpow.pop %v1715
    %v1717 = vmul.f32 %v1691, 1.442695
    %v1718 = vpow.pop %v1717
    %v1719 = vmul.f32 %v1692, 1.442695
    %v1720 = vpow.pop %v1719
    %v1721 = vmul.f32 %v1693, 1.442695
    %v1722 = vpow.pop %v1721
    %v1723 = vmul.f32 %v1694, 1.442695
    %v1724 = vpow.pop %v1723
    %v1725 = vmul.f32 %v1695, 1.442695
    %v1726 = vpow.pop %v1725
    %v1727 = vmul.f32 %v1696, 1.442695
    %v1728 = vpow.pop %v1727
    %v1729 = vadd.f32 %v1698, 1.0
    %v1730 = vadd.f32 %v1700, 1.0
    %v1731 = vadd.f32 %v1702, 1.0
    %v1732 = vadd.f32 %v1704, 1.0
    %v1733 = vadd.f32 %v1706, 1.0
    %v1734 = vadd.f32 %v1708, 1.0
    %v1735 = vadd.f32 %v1710, 1.0
    %v1736 = vadd.f32 %v1712, 1.0
    %v1737 = vadd.f32 %v1714, 1.0
    %v1738 = vadd.f32 %v1716, 1.0
    %v1739 = vadd.f32 %v1718, 1.0
    %v1740 = vadd.f32 %v1720, 1.0
    %v1741 = vadd.f32 %v1722, 1.0
    %v1742 = vadd.f32 %v1724, 1.0
    %v1743 = vadd.f32 %v1726, 1.0
    %v1744 = vadd.f32 %v1728, 1.0
    %v1745 = vrcp.pop %v1729
    %v1746 = vrcp.pop %v1730
    %v1747 = vrcp.pop %v1731
    %v1748 = vrcp.pop %v1732
    %v1749 = vrcp.pop %v1733
    %v1750 = vrcp.pop %v1734
    %v1751 = vrcp.pop %v1735
    %v1752 = vrcp.pop %v1736
    %v1753 = vrcp.pop %v1737
    %v1754 = vrcp.pop %v1738
    %v1755 = vrcp.pop %v1739
    %v1756 = vrcp.pop %v1740
    %v1757 = vrcp.pop %v1741
    %v1758 = vrcp.pop %v1742
    %v1759 = vrcp.pop %v1743
    %v1760 = vrcp.pop %v1744
    %v1761 = vmul.f32 %v1619, %v1745
    %v1762 = vmul.f32 %v1622, %v1746
    %v1763 = vmul.f32 %v1627, %v1747
    %v1764 = vmul.f32 %v1630, %v1748
    %v1765 = vmul.f32 %v1635, %v1749
    %v1766 = vmul.f32 %v1638, %v1750
    %v1767 = vmul.f32 %v1643, %v1751
    %v1768 = vmul.f32 %v1646, %v1752
    %v1769 = vmul.f32 %v1651, %v1753
    %v1770 = vmul.f32 %v1654, %v1754
    %v1771 = vmul.f32 %v1659, %v1755
    %v1772 = vmul.f32 %v1662, %v1756
    %v1773 = vmul.f32 %v1667, %v1757
    %v1774 = vmul.f32 %v1670, %v1758
    %v1775 = vmul.f32 %v1675, %v1759
    %v1776 = vmul.f32 %v1678, %v1760
    %s1777 = scalar_lea.vmem [#allocation2], 256
    %v1778 = vld [vmem:[%s1777] sm:$0xf]
    %v1779 = vld [vmem:[%s1777 + $0x4] sm:$0xf]
    %v1780 = vld [vmem:[%s1777 + $0x8] sm:$0xf]
    %v1781 = vld [vmem:[%s1777 + $0xc] sm:$0xf]
    %v1782 = vld [vmem:[%s1777 + $0x10] sm:$0xf]
    %v1783 = vld [vmem:[%s1777 + $0x14] sm:$0xf]
    %v1784 = vld [vmem:[%s1777 + $0x18] sm:$0xf]
    %v1785 = vld [vmem:[%s1777 + $0x1c] sm:$0xf]
    %v1786 = vld [vmem:[%s1777 + $0x20] sm:$0xf]
    %v1787 = vld [vmem:[%s1777 + $0x24] sm:$0xf]
    %v1788 = vld [vmem:[%s1777 + $0x28] sm:$0xf]
    %v1789 = vld [vmem:[%s1777 + $0x2c] sm:$0xf]
    %v1790 = vld [vmem:[%s1777 + $0x30] sm:$0xf]
    %v1791 = vld [vmem:[%s1777 + $0x34] sm:$0xf]
    %v1792 = vld [vmem:[%s1777 + $0x38] sm:$0xf]
    %v1793 = vld [vmem:[%s1777 + $0x3c] sm:$0xf]
    %v1794 = vpack.c.bf16 %v1762, %v1761
    %v1795 = vpack.c.bf16 %v1764, %v1763
    %v1796 = vpack.c.bf16 %v1766, %v1765
    %v1797 = vpack.c.bf16 %v1768, %v1767
    %v1798 = vpack.c.bf16 %v1770, %v1769
    %v1799 = vpack.c.bf16 %v1772, %v1771
    %v1800 = vpack.c.bf16 %v1774, %v1773
    %v1801 = vpack.c.bf16 %v1776, %v1775
    %1802 = vset.pattern.permute.xlu0 5
    %1803 = vperm.xlu0 %1802, %v50
    %v1804 = vpop.permute.xlu0 %1803
    %1806 = vset.pattern.permute.xlu0 5
    %1807 = vperm.xlu0 %1806, %v51
    %v1808 = vpop.permute.xlu0 %1807
    %1810 = vset.pattern.permute.xlu0 5
    %1811 = vperm.xlu0 %1810, %v52
    %v1812 = vpop.permute.xlu0 %1811
    %1814 = vset.pattern.permute.xlu0 5
    %1815 = vperm.xlu0 %1814, %v53
    %v1816 = vpop.permute.xlu0 %1815
    %1818 = vset.pattern.permute.xlu0 5
    %1819 = vperm.xlu0 %1818, %v54
    %v1820 = vpop.permute.xlu0 %1819
    %1822 = vset.pattern.permute.xlu0 5
    %1823 = vperm.xlu0 %1822, %v55
    %v1824 = vpop.permute.xlu0 %1823
    %1826 = vset.pattern.permute.xlu0 5
    %1827 = vperm.xlu0 %1826, %v56
    %v1828 = vpop.permute.xlu0 %1827
    %1830 = vset.pattern.permute.xlu0 5
    %1831 = vperm.xlu0 %1830, %v57
    %v1832 = vpop.permute.xlu0 %1831
    %1834 = vset.pattern.permute.xlu0 5
    %1835 = vperm.xlu0 %1834, %v58
    %v1836 = vpop.permute.xlu0 %1835
    %1838 = vset.pattern.permute.xlu0 5
    %1839 = vperm.xlu0 %1838, %v59
    %v1840 = vpop.permute.xlu0 %1839
    %1842 = vset.pattern.permute.xlu0 5
    %1843 = vperm.xlu0 %1842, %v60
    %v1844 = vpop.permute.xlu0 %1843
    %1846 = vset.pattern.permute.xlu0 5
    %1847 = vperm.xlu0 %1846, %v61
    %v1848 = vpop.permute.xlu0 %1847
    %1850 = vset.pattern.permute.xlu0 5
    %1851 = vperm.xlu0 %1850, %v62
    %v1852 = vpop.permute.xlu0 %1851
    %1854 = vset.pattern.permute.xlu0 5
    %1855 = vperm.xlu0 %1854, %v63
    %v1856 = vpop.permute.xlu0 %1855
    %1858 = vset.pattern.permute.xlu0 5
    %1859 = vperm.xlu0 %1858, %v64
    %v1860 = vpop.permute.xlu0 %1859
    %1862 = vset.pattern.permute.xlu0 5
    %1863 = vperm.xlu0 %1862, %v65
    %v1864 = vpop.permute.xlu0 %1863
    %v1882 = vunpack.c.l.b16 %v1778
    %v1883 = vunpack.c.l.b16 %v1779
    %v1884 = vunpack.c.l.b16 %v1780
    %v1885 = vunpack.c.l.b16 %v1781
    %v1886 = vunpack.c.l.b16 %v1782
    %v1887 = vunpack.c.l.b16 %v1783
    %v1888 = vunpack.c.l.b16 %v1784
    %v1889 = vunpack.c.l.b16 %v1785
    %v1890 = vunpack.c.l.b16 %v1786
    %v1891 = vunpack.c.l.b16 %v1787
    %v1892 = vunpack.c.l.b16 %v1788
    %v1893 = vunpack.c.l.b16 %v1789
    %v1894 = vunpack.c.l.b16 %v1790
    %v1895 = vunpack.c.l.b16 %v1791
    %v1896 = vunpack.c.l.b16 %v1792
    %v1897 = vunpack.c.l.b16 %v1793
    %v1898 = vpack.c.b16 %v1883, %v1882
    %v1899 = vpack.c.b16 %v1885, %v1884
    %v1900 = vpack.c.b16 %v1887, %v1886
    %v1901 = vpack.c.b16 %v1889, %v1888
    %v1902 = vpack.c.b16 %v1891, %v1890
    %v1903 = vpack.c.b16 %v1893, %v1892
    %v1904 = vpack.c.b16 %v1895, %v1894
    %v1905 = vpack.c.b16 %v1897, %v1896
    %1914 = vmatprep.subr.bf16.mxu0 0
    %1915 = vmatpush1.bf16.msra.mxu0 %v1801
    %1916 = vmatprep.subr.bf16.mxu0 0
    %1917 = vmatpush1.bf16.msra.mxu0 %v1800
    %1918 = vmatprep.subr.bf16.mxu0 0
    %1919 = vmatpush1.bf16.msra.mxu0 %v1799
    %1920 = vmatprep.subr.bf16.mxu0 0
    %1921 = vmatpush1.bf16.msra.mxu0 %v1798
    %1922 = vmatprep.subr.bf16.mxu0 0
    %1923 = vmatpush1.bf16.msra.mxu0 %v1797
    %1924 = vmatprep.subr.bf16.mxu0 0
    %1925 = vmatpush1.bf16.msra.mxu0 %v1796
    %1926 = vmatprep.subr.bf16.mxu0 0
    %1927 = vmatpush1.bf16.msra.mxu0 %v1795
    %1928 = vmatprep.subr.bf16.mxu0 0
    %1929 = vmatpush1.bf16.msra.mxu0 %v1794
    %1930 = vmatprep.subr.bf16.mxu0 0
    %1931 = vmatpush2.bf16.msra.mxu0 0
    %1932 = vmatprep.subr.bf16.mxu0 0
    %1933 = vmatpush2.bf16.msra.mxu0 0
    %1934 = vmatprep.subr.bf16.mxu0 0
    %1935 = vmatpush2.bf16.msra.mxu0 0
    %1936 = vmatprep.subr.bf16.mxu0 0
    %1937 = vmatpush2.bf16.msra.mxu0 0
    %1938 = vmatprep.subr.bf16.mxu0 0
    %1939 = vmatpush2.bf16.msra.mxu0 0
    %1940 = vmatprep.subr.bf16.mxu0 0
    %1941 = vmatpush2.bf16.msra.mxu0 0
    %1942 = vmatprep.subr.bf16.mxu0 0
    %1943 = vmatpush2.bf16.msra.mxu0 0
    %1944 = vmatprep.subr.bf16.mxu0 0
    %1945 = vmatpush2.bf16.msra.mxu0 0
    %1946 = vmatprep.mubr.bf16.mxu0 0
    %1947 = vmatmul.mubr.bf16.gmra.mxu0 %v1898
    %v1948 = vpop.f32.mrf.mxu0
    %v1949 = vadd.f32 %v1804, %v1948
    %v1950 = vpop.f32.mrf.mxu0
    %v1951 = vpop.f32.mrf.mxu0
    %v1952 = vadd.f32 %v1808, %v1951
    %v1953 = vpop.f32.mrf.mxu0
    %1954 = vmatprep.mubr.bf16.mxu0 0
    %1955 = vmatmul.mubr.bf16.gmra.mxu0 %v1899
    %v1956 = vpop.f32.mrf.mxu0
    %v1957 = vadd.f32 %v1812, %v1956
    %v1958 = vpop.f32.mrf.mxu0
    %v1959 = vpop.f32.mrf.mxu0
    %v1960 = vadd.f32 %v1816, %v1959
    %v1961 = vpop.f32.mrf.mxu0
    %1962 = vmatprep.mubr.bf16.mxu0 0
    %1963 = vmatmul.mubr.bf16.gmra.mxu0 %v1900
    %v1964 = vpop.f32.mrf.mxu0
    %v1965 = vadd.f32 %v1820, %v1964
    %v1966 = vpop.f32.mrf.mxu0
    %v1967 = vpop.f32.mrf.mxu0
    %v1968 = vadd.f32 %v1824, %v1967
    %v1969 = vpop.f32.mrf.mxu0
    %1970 = vmatprep.mubr.bf16.mxu0 0
    %1971 = vmatmul.mubr.bf16.gmra.mxu0 %v1901
    %v1972 = vpop.f32.mrf.mxu0
    %v1973 = vadd.f32 %v1828, %v1972
    %v1974 = vpop.f32.mrf.mxu0
    %v1975 = vpop.f32.mrf.mxu0
    %v1976 = vadd.f32 %v1832, %v1975
    %v1977 = vpop.f32.mrf.mxu0
    %1978 = vmatprep.mubr.bf16.mxu0 0
    %1979 = vmatmul.mubr.bf16.gmra.mxu0 %v1902
    %v1980 = vpop.f32.mrf.mxu0
    %v1981 = vadd.f32 %v1836, %v1980
    %v1982 = vpop.f32.mrf.mxu0
    %v1983 = vpop.f32.mrf.mxu0
    %v1984 = vadd.f32 %v1840, %v1983
    %v1985 = vpop.f32.mrf.mxu0
    %1986 = vmatprep.mubr.bf16.mxu0 0
    %1987 = vmatmul.mubr.bf16.gmra.mxu0 %v1903
    %v1988 = vpop.f32.mrf.mxu0
    %v1989 = vadd.f32 %v1844, %v1988
    %v1990 = vpop.f32.mrf.mxu0
    %v1991 = vpop.f32.mrf.mxu0
    %v1992 = vadd.f32 %v1848, %v1991
    %v1993 = vpop.f32.mrf.mxu0
    %1994 = vmatprep.mubr.bf16.mxu0 0
    %1995 = vmatmul.mubr.bf16.gmra.mxu0 %v1904
    %v1996 = vpop.f32.mrf.mxu0
    %v1997 = vadd.f32 %v1852, %v1996
    %v1998 = vpop.f32.mrf.mxu0
    %v1999 = vpop.f32.mrf.mxu0
    %v2000 = vadd.f32 %v1856, %v1999
    %v2001 = vpop.f32.mrf.mxu0
    %2002 = vmatprep.mubr.bf16.mxu0 0
    %2003 = vmatmul.mubr.bf16.gmra.mxu0 %v1905
    %v2004 = vpop.f32.mrf.mxu0
    %v2005 = vadd.f32 %v1860, %v2004
    %v2006 = vpop.f32.mrf.mxu0
    %v2007 = vpop.f32.mrf.mxu0
    %v2008 = vadd.f32 %v1864, %v2007
    %v2009 = vpop.f32.mrf.mxu0
    %2010 = vdwg.mxu0
    %v2011 = vsub.f32 0.0, %v1949
    %v2012 = vsub.f32 0.0, %v1952
    %v2013 = vsub.f32 0.0, %v1957
    %v2014 = vsub.f32 0.0, %v1960
    %v2015 = vsub.f32 0.0, %v1965
    %v2016 = vsub.f32 0.0, %v1968
    %v2017 = vsub.f32 0.0, %v1973
    %v2018 = vsub.f32 0.0, %v1976
    %v2019 = vsub.f32 0.0, %v1981
    %v2020 = vsub.f32 0.0, %v1984
    %v2021 = vsub.f32 0.0, %v1989
    %v2022 = vsub.f32 0.0, %v1992
    %v2023 = vsub.f32 0.0, %v1997
    %v2024 = vsub.f32 0.0, %v2000
    %v2025 = vsub.f32 0.0, %v2005
    %v2026 = vsub.f32 0.0, %v2008
    %v2027 = vmul.f32 %v2011, 1.442695
    %v2028 = vpow.pop %v2027
    %v2029 = vmul.f32 %v2012, 1.442695
    %v2030 = vpow.pop %v2029
    %v2031 = vmul.f32 %v2013, 1.442695
    %v2032 = vpow.pop %v2031
    %v2033 = vmul.f32 %v2014, 1.442695
    %v2034 = vpow.pop %v2033
    %v2035 = vmul.f32 %v2015, 1.442695
    %v2036 = vpow.pop %v2035
    %v2037 = vmul.f32 %v2016, 1.442695
    %v2038 = vpow.pop %v2037
    %v2039 = vmul.f32 %v2017, 1.442695
    %v2040 = vpow.pop %v2039
    %v2041 = vmul.f32 %v2018, 1.442695
    %v2042 = vpow.pop %v2041
    %v2043 = vmul.f32 %v2019, 1.442695
    %v2044 = vpow.pop %v2043
    %v2045 = vmul.f32 %v2020, 1.442695
    %v2046 = vpow.pop %v2045
    %v2047 = vmul.f32 %v2021, 1.442695
    %v2048 = vpow.pop %v2047
    %v2049 = vmul.f32 %v2022, 1.442695
    %v2050 = vpow.pop %v2049
    %v2051 = vmul.f32 %v2023, 1.442695
    %v2052 = vpow.pop %v2051
    %v2053 = vmul.f32 %v2024, 1.442695
    %v2054 = vpow.pop %v2053
    %v2055 = vmul.f32 %v2025, 1.442695
    %v2056 = vpow.pop %v2055
    %v2057 = vmul.f32 %v2026, 1.442695
    %v2058 = vpow.pop %v2057
    %v2059 = vadd.f32 %v2028, 1.0
    %v2060 = vadd.f32 %v2030, 1.0
    %v2061 = vadd.f32 %v2032, 1.0
    %v2062 = vadd.f32 %v2034, 1.0
    %v2063 = vadd.f32 %v2036, 1.0
    %v2064 = vadd.f32 %v2038, 1.0
    %v2065 = vadd.f32 %v2040, 1.0
    %v2066 = vadd.f32 %v2042, 1.0
    %v2067 = vadd.f32 %v2044, 1.0
    %v2068 = vadd.f32 %v2046, 1.0
    %v2069 = vadd.f32 %v2048, 1.0
    %v2070 = vadd.f32 %v2050, 1.0
    %v2071 = vadd.f32 %v2052, 1.0
    %v2072 = vadd.f32 %v2054, 1.0
    %v2073 = vadd.f32 %v2056, 1.0
    %v2074 = vadd.f32 %v2058, 1.0
    %v2075 = vrcp.pop %v2059
    %v2076 = vrcp.pop %v2060
    %v2077 = vrcp.pop %v2061
    %v2078 = vrcp.pop %v2062
    %v2079 = vrcp.pop %v2063
    %v2080 = vrcp.pop %v2064
    %v2081 = vrcp.pop %v2065
    %v2082 = vrcp.pop %v2066
    %v2083 = vrcp.pop %v2067
    %v2084 = vrcp.pop %v2068
    %v2085 = vrcp.pop %v2069
    %v2086 = vrcp.pop %v2070
    %v2087 = vrcp.pop %v2071
    %v2088 = vrcp.pop %v2072
    %v2089 = vrcp.pop %v2073
    %v2090 = vrcp.pop %v2074
    %v2091 = vmul.f32 %v1949, %v2075
    %v2092 = vmul.f32 %v1952, %v2076
    %v2093 = vmul.f32 %v1957, %v2077
    %v2094 = vmul.f32 %v1960, %v2078
    %v2095 = vmul.f32 %v1965, %v2079
    %v2096 = vmul.f32 %v1968, %v2080
    %v2097 = vmul.f32 %v1973, %v2081
    %v2098 = vmul.f32 %v1976, %v2082
    %v2099 = vmul.f32 %v1981, %v2083
    %v2100 = vmul.f32 %v1984, %v2084
    %v2101 = vmul.f32 %v1989, %v2085
    %v2102 = vmul.f32 %v1992, %v2086
    %v2103 = vmul.f32 %v1997, %v2087
    %v2104 = vmul.f32 %v2000, %v2088
    %v2105 = vmul.f32 %v2005, %v2089
    %v2106 = vmul.f32 %v2008, %v2090
    %s2107 = scalar_lea.vmem [#allocation2], 320
    %v2108 = vld [vmem:[%s2107] sm:$0xf]
    %v2109 = vld [vmem:[%s2107 + $0x4] sm:$0xf]
    %v2110 = vld [vmem:[%s2107 + $0x8] sm:$0xf]
    %v2111 = vld [vmem:[%s2107 + $0xc] sm:$0xf]
    %v2112 = vld [vmem:[%s2107 + $0x10] sm:$0xf]
    %v2113 = vld [vmem:[%s2107 + $0x14] sm:$0xf]
    %v2114 = vld [vmem:[%s2107 + $0x18] sm:$0xf]
    %v2115 = vld [vmem:[%s2107 + $0x1c] sm:$0xf]
    %v2116 = vld [vmem:[%s2107 + $0x20] sm:$0xf]
    %v2117 = vld [vmem:[%s2107 + $0x24] sm:$0xf]
    %v2118 = vld [vmem:[%s2107 + $0x28] sm:$0xf]
    %v2119 = vld [vmem:[%s2107 + $0x2c] sm:$0xf]
    %v2120 = vld [vmem:[%s2107 + $0x30] sm:$0xf]
    %v2121 = vld [vmem:[%s2107 + $0x34] sm:$0xf]
    %v2122 = vld [vmem:[%s2107 + $0x38] sm:$0xf]
    %v2123 = vld [vmem:[%s2107 + $0x3c] sm:$0xf]
    %v2124 = vpack.c.bf16 %v2092, %v2091
    %v2125 = vpack.c.bf16 %v2094, %v2093
    %v2126 = vpack.c.bf16 %v2096, %v2095
    %v2127 = vpack.c.bf16 %v2098, %v2097
    %v2128 = vpack.c.bf16 %v2100, %v2099
    %v2129 = vpack.c.bf16 %v2102, %v2101
    %v2130 = vpack.c.bf16 %v2104, %v2103
    %v2131 = vpack.c.bf16 %v2106, %v2105
    %2132 = vset.pattern.permute.xlu0 6
    %2133 = vperm.xlu0 %2132, %v50
    %v2134 = vpop.permute.xlu0 %2133
    %2136 = vset.pattern.permute.xlu0 6
    %2137 = vperm.xlu0 %2136, %v51
    %v2138 = vpop.permute.xlu0 %2137
    %2140 = vset.pattern.permute.xlu0 6
    %2141 = vperm.xlu0 %2140, %v52
    %v2142 = vpop.permute.xlu0 %2141
    %2144 = vset.pattern.permute.xlu0 6
    %2145 = vperm.xlu0 %2144, %v53
    %v2146 = vpop.permute.xlu0 %2145
    %2148 = vset.pattern.permute.xlu0 6
    %2149 = vperm.xlu0 %2148, %v54
    %v2150 = vpop.permute.xlu0 %2149
    %2152 = vset.pattern.permute.xlu0 6
    %2153 = vperm.xlu0 %2152, %v55
    %v2154 = vpop.permute.xlu0 %2153
    %2156 = vset.pattern.permute.xlu0 6
    %2157 = vperm.xlu0 %2156, %v56
    %v2158 = vpop.permute.xlu0 %2157
    %2160 = vset.pattern.permute.xlu0 6
    %2161 = vperm.xlu0 %2160, %v57
    %v2162 = vpop.permute.xlu0 %2161
    %2164 = vset.pattern.permute.xlu0 6
    %2165 = vperm.xlu0 %2164, %v58
    %v2166 = vpop.permute.xlu0 %2165
    %2168 = vset.pattern.permute.xlu0 6
    %2169 = vperm.xlu0 %2168, %v59
    %v2170 = vpop.permute.xlu0 %2169
    %2172 = vset.pattern.permute.xlu0 6
    %2173 = vperm.xlu0 %2172, %v60
    %v2174 = vpop.permute.xlu0 %2173
    %2176 = vset.pattern.permute.xlu0 6
    %2177 = vperm.xlu0 %2176, %v61
    %v2178 = vpop.permute.xlu0 %2177
    %2180 = vset.pattern.permute.xlu0 6
    %2181 = vperm.xlu0 %2180, %v62
    %v2182 = vpop.permute.xlu0 %2181
    %2184 = vset.pattern.permute.xlu0 6
    %2185 = vperm.xlu0 %2184, %v63
    %v2186 = vpop.permute.xlu0 %2185
    %2188 = vset.pattern.permute.xlu0 6
    %2189 = vperm.xlu0 %2188, %v64
    %v2190 = vpop.permute.xlu0 %2189
    %2192 = vset.pattern.permute.xlu0 6
    %2193 = vperm.xlu0 %2192, %v65
    %v2194 = vpop.permute.xlu0 %2193
    %v2212 = vunpack.c.l.b16 %v2108
    %v2213 = vunpack.c.l.b16 %v2109
    %v2214 = vunpack.c.l.b16 %v2110
    %v2215 = vunpack.c.l.b16 %v2111
    %v2216 = vunpack.c.l.b16 %v2112
    %v2217 = vunpack.c.l.b16 %v2113
    %v2218 = vunpack.c.l.b16 %v2114
    %v2219 = vunpack.c.l.b16 %v2115
    %v2220 = vunpack.c.l.b16 %v2116
    %v2221 = vunpack.c.l.b16 %v2117
    %v2222 = vunpack.c.l.b16 %v2118
    %v2223 = vunpack.c.l.b16 %v2119
    %v2224 = vunpack.c.l.b16 %v2120
    %v2225 = vunpack.c.l.b16 %v2121
    %v2226 = vunpack.c.l.b16 %v2122
    %v2227 = vunpack.c.l.b16 %v2123
    %v2228 = vpack.c.b16 %v2213, %v2212
    %v2229 = vpack.c.b16 %v2215, %v2214
    %v2230 = vpack.c.b16 %v2217, %v2216
    %v2231 = vpack.c.b16 %v2219, %v2218
    %v2232 = vpack.c.b16 %v2221, %v2220
    %v2233 = vpack.c.b16 %v2223, %v2222
    %v2234 = vpack.c.b16 %v2225, %v2224
    %v2235 = vpack.c.b16 %v2227, %v2226
    %2244 = vmatprep.subr.bf16.mxu0 0
    %2245 = vmatpush1.bf16.msra.mxu0 %v2131
    %2246 = vmatprep.subr.bf16.mxu0 0
    %2247 = vmatpush1.bf16.msra.mxu0 %v2130
    %2248 = vmatprep.subr.bf16.mxu0 0
    %2249 = vmatpush1.bf16.msra.mxu0 %v2129
    %2250 = vmatprep.subr.bf16.mxu0 0
    %2251 = vmatpush1.bf16.msra.mxu0 %v2128
    %2252 = vmatprep.subr.bf16.mxu0 0
    %2253 = vmatpush1.bf16.msra.mxu0 %v2127
    %2254 = vmatprep.subr.bf16.mxu0 0
    %2255 = vmatpush1.bf16.msra.mxu0 %v2126
    %2256 = vmatprep.subr.bf16.mxu0 0
    %2257 = vmatpush1.bf16.msra.mxu0 %v2125
    %2258 = vmatprep.subr.bf16.mxu0 0
    %2259 = vmatpush1.bf16.msra.mxu0 %v2124
    %2260 = vmatprep.subr.bf16.mxu0 0
    %2261 = vmatpush2.bf16.msra.mxu0 0
    %2262 = vmatprep.subr.bf16.mxu0 0
    %2263 = vmatpush2.bf16.msra.mxu0 0
    %2264 = vmatprep.subr.bf16.mxu0 0
    %2265 = vmatpush2.bf16.msra.mxu0 0
    %2266 = vmatprep.subr.bf16.mxu0 0
    %2267 = vmatpush2.bf16.msra.mxu0 0
    %2268 = vmatprep.subr.bf16.mxu0 0
    %2269 = vmatpush2.bf16.msra.mxu0 0
    %2270 = vmatprep.subr.bf16.mxu0 0
    %2271 = vmatpush2.bf16.msra.mxu0 0
    %2272 = vmatprep.subr.bf16.mxu0 0
    %2273 = vmatpush2.bf16.msra.mxu0 0
    %2274 = vmatprep.subr.bf16.mxu0 0
    %2275 = vmatpush2.bf16.msra.mxu0 0
    %2276 = vmatprep.mubr.bf16.mxu0 0
    %2277 = vmatmul.mubr.bf16.gmra.mxu0 %v2228
    %v2278 = vpop.f32.mrf.mxu0
    %v2279 = vadd.f32 %v2134, %v2278
    %v2280 = vpop.f32.mrf.mxu0
    %v2281 = vpop.f32.mrf.mxu0
    %v2282 = vadd.f32 %v2138, %v2281
    %v2283 = vpop.f32.mrf.mxu0
    %2284 = vmatprep.mubr.bf16.mxu0 0
    %2285 = vmatmul.mubr.bf16.gmra.mxu0 %v2229
    %v2286 = vpop.f32.mrf.mxu0
    %v2287 = vadd.f32 %v2142, %v2286
    %v2288 = vpop.f32.mrf.mxu0
    %v2289 = vpop.f32.mrf.mxu0
    %v2290 = vadd.f32 %v2146, %v2289
    %v2291 = vpop.f32.mrf.mxu0
    %2292 = vmatprep.mubr.bf16.mxu0 0
    %2293 = vmatmul.mubr.bf16.gmra.mxu0 %v2230
    %v2294 = vpop.f32.mrf.mxu0
    %v2295 = vadd.f32 %v2150, %v2294
    %v2296 = vpop.f32.mrf.mxu0
    %v2297 = vpop.f32.mrf.mxu0
    %v2298 = vadd.f32 %v2154, %v2297
    %v2299 = vpop.f32.mrf.mxu0
    %2300 = vmatprep.mubr.bf16.mxu0 0
    %2301 = vmatmul.mubr.bf16.gmra.mxu0 %v2231
    %v2302 = vpop.f32.mrf.mxu0
    %v2303 = vadd.f32 %v2158, %v2302
    %v2304 = vpop.f32.mrf.mxu0
    %v2305 = vpop.f32.mrf.mxu0
    %v2306 = vadd.f32 %v2162, %v2305
    %v2307 = vpop.f32.mrf.mxu0
    %2308 = vmatprep.mubr.bf16.mxu0 0
    %2309 = vmatmul.mubr.bf16.gmra.mxu0 %v2232
    %v2310 = vpop.f32.mrf.mxu0
    %v2311 = vadd.f32 %v2166, %v2310
    %v2312 = vpop.f32.mrf.mxu0
    %v2313 = vpop.f32.mrf.mxu0
    %v2314 = vadd.f32 %v2170, %v2313
    %v2315 = vpop.f32.mrf.mxu0
    %2316 = vmatprep.mubr.bf16.mxu0 0
    %2317 = vmatmul.mubr.bf16.gmra.mxu0 %v2233
    %v2318 = vpop.f32.mrf.mxu0
    %v2319 = vadd.f32 %v2174, %v2318
    %v2320 = vpop.f32.mrf.mxu0
    %v2321 = vpop.f32.mrf.mxu0
    %v2322 = vadd.f32 %v2178, %v2321
    %v2323 = vpop.f32.mrf.mxu0
    %2324 = vmatprep.mubr.bf16.mxu0 0
    %2325 = vmatmul.mubr.bf16.gmra.mxu0 %v2234
    %v2326 = vpop.f32.mrf.mxu0
    %v2327 = vadd.f32 %v2182, %v2326
    %v2328 = vpop.f32.mrf.mxu0
    %v2329 = vpop.f32.mrf.mxu0
    %v2330 = vadd.f32 %v2186, %v2329
    %v2331 = vpop.f32.mrf.mxu0
    %2332 = vmatprep.mubr.bf16.mxu0 0
    %2333 = vmatmul.mubr.bf16.gmra.mxu0 %v2235
    %v2334 = vpop.f32.mrf.mxu0
    %v2335 = vadd.f32 %v2190, %v2334
    %v2336 = vpop.f32.mrf.mxu0
    %v2337 = vpop.f32.mrf.mxu0
    %v2338 = vadd.f32 %v2194, %v2337
    %v2339 = vpop.f32.mrf.mxu0
    %2340 = vdwg.mxu0
    %v2341 = vsub.f32 0.0, %v2279
    %v2342 = vsub.f32 0.0, %v2282
    %v2343 = vsub.f32 0.0, %v2287
    %v2344 = vsub.f32 0.0, %v2290
    %v2345 = vsub.f32 0.0, %v2295
    %v2346 = vsub.f32 0.0, %v2298
    %v2347 = vsub.f32 0.0, %v2303
    %v2348 = vsub.f32 0.0, %v2306
    %v2349 = vsub.f32 0.0, %v2311
    %v2350 = vsub.f32 0.0, %v2314
    %v2351 = vsub.f32 0.0, %v2319
    %v2352 = vsub.f32 0.0, %v2322
    %v2353 = vsub.f32 0.0, %v2327
    %v2354 = vsub.f32 0.0, %v2330
    %v2355 = vsub.f32 0.0, %v2335
    %v2356 = vsub.f32 0.0, %v2338
    %v2357 = vmul.f32 %v2341, 1.442695
    %v2358 = vpow.pop %v2357
    %v2359 = vmul.f32 %v2342, 1.442695
    %v2360 = vpow.pop %v2359
    %v2361 = vmul.f32 %v2343, 1.442695
    %v2362 = vpow.pop %v2361
    %v2363 = vmul.f32 %v2344, 1.442695
    %v2364 = vpow.pop %v2363
    %v2365 = vmul.f32 %v2345, 1.442695
    %v2366 = vpow.pop %v2365
    %v2367 = vmul.f32 %v2346, 1.442695
    %v2368 = vpow.pop %v2367
    %v2369 = vmul.f32 %v2347, 1.442695
    %v2370 = vpow.pop %v2369
    %v2371 = vmul.f32 %v2348, 1.442695
    %v2372 = vpow.pop %v2371
    %v2373 = vmul.f32 %v2349, 1.442695
    %v2374 = vpow.pop %v2373
    %v2375 = vmul.f32 %v2350, 1.442695
    %v2376 = vpow.pop %v2375
    %v2377 = vmul.f32 %v2351, 1.442695
    %v2378 = vpow.pop %v2377
    %v2379 = vmul.f32 %v2352, 1.442695
    %v2380 = vpow.pop %v2379
    %v2381 = vmul.f32 %v2353, 1.442695
    %v2382 = vpow.pop %v2381
    %v2383 = vmul.f32 %v2354, 1.442695
    %v2384 = vpow.pop %v2383
    %v2385 = vmul.f32 %v2355, 1.442695
    %v2386 = vpow.pop %v2385
    %v2387 = vmul.f32 %v2356, 1.442695
    %v2388 = vpow.pop %v2387
    %v2389 = vadd.f32 %v2358, 1.0
    %v2390 = vadd.f32 %v2360, 1.0
    %v2391 = vadd.f32 %v2362, 1.0
    %v2392 = vadd.f32 %v2364, 1.0
    %v2393 = vadd.f32 %v2366, 1.0
    %v2394 = vadd.f32 %v2368, 1.0
    %v2395 = vadd.f32 %v2370, 1.0
    %v2396 = vadd.f32 %v2372, 1.0
    %v2397 = vadd.f32 %v2374, 1.0
    %v2398 = vadd.f32 %v2376, 1.0
    %v2399 = vadd.f32 %v2378, 1.0
    %v2400 = vadd.f32 %v2380, 1.0
    %v2401 = vadd.f32 %v2382, 1.0
    %v2402 = vadd.f32 %v2384, 1.0
    %v2403 = vadd.f32 %v2386, 1.0
    %v2404 = vadd.f32 %v2388, 1.0
    %v2405 = vrcp.pop %v2389
    %v2406 = vrcp.pop %v2390
    %v2407 = vrcp.pop %v2391
    %v2408 = vrcp.pop %v2392
    %v2409 = vrcp.pop %v2393
    %v2410 = vrcp.pop %v2394
    %v2411 = vrcp.pop %v2395
    %v2412 = vrcp.pop %v2396
    %v2413 = vrcp.pop %v2397
    %v2414 = vrcp.pop %v2398
    %v2415 = vrcp.pop %v2399
    %v2416 = vrcp.pop %v2400
    %v2417 = vrcp.pop %v2401
    %v2418 = vrcp.pop %v2402
    %v2419 = vrcp.pop %v2403
    %v2420 = vrcp.pop %v2404
    %v2421 = vmul.f32 %v2279, %v2405
    %v2422 = vmul.f32 %v2282, %v2406
    %v2423 = vmul.f32 %v2287, %v2407
    %v2424 = vmul.f32 %v2290, %v2408
    %v2425 = vmul.f32 %v2295, %v2409
    %v2426 = vmul.f32 %v2298, %v2410
    %v2427 = vmul.f32 %v2303, %v2411
    %v2428 = vmul.f32 %v2306, %v2412
    %v2429 = vmul.f32 %v2311, %v2413
    %v2430 = vmul.f32 %v2314, %v2414
    %v2431 = vmul.f32 %v2319, %v2415
    %v2432 = vmul.f32 %v2322, %v2416
    %v2433 = vmul.f32 %v2327, %v2417
    %v2434 = vmul.f32 %v2330, %v2418
    %v2435 = vmul.f32 %v2335, %v2419
    %v2436 = vmul.f32 %v2338, %v2420
    %s2437 = scalar_lea.vmem [#allocation2], 384
    %v2438 = vld [vmem:[%s2437] sm:$0xf]
    %v2439 = vld [vmem:[%s2437 + $0x4] sm:$0xf]
    %v2440 = vld [vmem:[%s2437 + $0x8] sm:$0xf]
    %v2441 = vld [vmem:[%s2437 + $0xc] sm:$0xf]
    %v2442 = vld [vmem:[%s2437 + $0x10] sm:$0xf]
    %v2443 = vld [vmem:[%s2437 + $0x14] sm:$0xf]
    %v2444 = vld [vmem:[%s2437 + $0x18] sm:$0xf]
    %v2445 = vld [vmem:[%s2437 + $0x1c] sm:$0xf]
    %v2446 = vld [vmem:[%s2437 + $0x20] sm:$0xf]
    %v2447 = vld [vmem:[%s2437 + $0x24] sm:$0xf]
    %v2448 = vld [vmem:[%s2437 + $0x28] sm:$0xf]
    %v2449 = vld [vmem:[%s2437 + $0x2c] sm:$0xf]
    %v2450 = vld [vmem:[%s2437 + $0x30] sm:$0xf]
    %v2451 = vld [vmem:[%s2437 + $0x34] sm:$0xf]
    %v2452 = vld [vmem:[%s2437 + $0x38] sm:$0xf]
    %v2453 = vld [vmem:[%s2437 + $0x3c] sm:$0xf]
    %v2454 = vpack.c.bf16 %v2422, %v2421
    %v2455 = vpack.c.bf16 %v2424, %v2423
    %v2456 = vpack.c.bf16 %v2426, %v2425
    %v2457 = vpack.c.bf16 %v2428, %v2427
    %v2458 = vpack.c.bf16 %v2430, %v2429
    %v2459 = vpack.c.bf16 %v2432, %v2431
    %v2460 = vpack.c.bf16 %v2434, %v2433
    %v2461 = vpack.c.bf16 %v2436, %v2435
    %2462 = vset.pattern.permute.xlu0 7
    %2463 = vperm.xlu0 %2462, %v50
    %v2464 = vpop.permute.xlu0 %2463
    %2466 = vset.pattern.permute.xlu0 7
    %2467 = vperm.xlu0 %2466, %v51
    %v2468 = vpop.permute.xlu0 %2467
    %2469 = vset.pattern.permute.xlu0 7
    %2470 = vperm.xlu0 %2469, %v52
    %v2471 = vpop.permute.xlu0 %2470
    %2472 = vset.pattern.permute.xlu0 7
    %2473 = vperm.xlu0 %2472, %v53
    %v2474 = vpop.permute.xlu0 %2473
    %2475 = vset.pattern.permute.xlu0 7
    %2476 = vperm.xlu0 %2475, %v54
    %v2477 = vpop.permute.xlu0 %2476
    %2478 = vset.pattern.permute.xlu0 7
    %2479 = vperm.xlu0 %2478, %v55
    %v2480 = vpop.permute.xlu0 %2479
    %2481 = vset.pattern.permute.xlu0 7
    %2482 = vperm.xlu0 %2481, %v56
    %v2483 = vpop.permute.xlu0 %2482
    %2484 = vset.pattern.permute.xlu0 7
    %2485 = vperm.xlu0 %2484, %v57
    %v2486 = vpop.permute.xlu0 %2485
    %2487 = vset.pattern.permute.xlu0 7
    %2488 = vperm.xlu0 %2487, %v58
    %v2489 = vpop.permute.xlu0 %2488
    %2490 = vset.pattern.permute.xlu0 7
    %2491 = vperm.xlu0 %2490, %v59
    %v2492 = vpop.permute.xlu0 %2491
    %2493 = vset.pattern.permute.xlu0 7
    %2494 = vperm.xlu0 %2493, %v60
    %v2495 = vpop.permute.xlu0 %2494
    %2496 = vset.pattern.permute.xlu0 7
    %2497 = vperm.xlu0 %2496, %v61
    %v2498 = vpop.permute.xlu0 %2497
    %2499 = vset.pattern.permute.xlu0 7
    %2500 = vperm.xlu0 %2499, %v62
    %v2501 = vpop.permute.xlu0 %2500
    %2502 = vset.pattern.permute.xlu0 7
    %2503 = vperm.xlu0 %2502, %v63
    %v2504 = vpop.permute.xlu0 %2503
    %2505 = vset.pattern.permute.xlu0 7
    %2506 = vperm.xlu0 %2505, %v64
    %v2507 = vpop.permute.xlu0 %2506
    %2508 = vset.pattern.permute.xlu0 7
    %2509 = vperm.xlu0 %2508, %v65
    %v2510 = vpop.permute.xlu0 %2509
    %v2527 = vunpack.c.l.b16 %v2438
    %v2528 = vunpack.c.l.b16 %v2439
    %v2529 = vunpack.c.l.b16 %v2440
    %v2530 = vunpack.c.l.b16 %v2441
    %v2531 = vunpack.c.l.b16 %v2442
    %v2532 = vunpack.c.l.b16 %v2443
    %v2533 = vunpack.c.l.b16 %v2444
    %v2534 = vunpack.c.l.b16 %v2445
    %v2535 = vunpack.c.l.b16 %v2446
    %v2536 = vunpack.c.l.b16 %v2447
    %v2537 = vunpack.c.l.b16 %v2448
    %v2538 = vunpack.c.l.b16 %v2449
    %v2539 = vunpack.c.l.b16 %v2450
    %v2540 = vunpack.c.l.b16 %v2451
    %v2541 = vunpack.c.l.b16 %v2452
    %v2542 = vunpack.c.l.b16 %v2453
    %v2543 = vpack.c.b16 %v2528, %v2527
    %v2544 = vpack.c.b16 %v2530, %v2529
    %v2545 = vpack.c.b16 %v2532, %v2531
    %v2546 = vpack.c.b16 %v2534, %v2533
    %v2547 = vpack.c.b16 %v2536, %v2535
    %v2548 = vpack.c.b16 %v2538, %v2537
    %v2549 = vpack.c.b16 %v2540, %v2539
    %v2550 = vpack.c.b16 %v2542, %v2541
    %2559 = vmatprep.subr.bf16.mxu0 0
    %2560 = vmatpush1.bf16.msra.mxu0 %v2461
    %2561 = vmatprep.subr.bf16.mxu0 0
    %2562 = vmatpush1.bf16.msra.mxu0 %v2460
    %2563 = vmatprep.subr.bf16.mxu0 0
    %2564 = vmatpush1.bf16.msra.mxu0 %v2459
    %2565 = vmatprep.subr.bf16.mxu0 0
    %2566 = vmatpush1.bf16.msra.mxu0 %v2458
    %2567 = vmatprep.subr.bf16.mxu0 0
    %2568 = vmatpush1.bf16.msra.mxu0 %v2457
    %2569 = vmatprep.subr.bf16.mxu0 0
    %2570 = vmatpush1.bf16.msra.mxu0 %v2456
    %2571 = vmatprep.subr.bf16.mxu0 0
    %2572 = vmatpush1.bf16.msra.mxu0 %v2455
    %2573 = vmatprep.subr.bf16.mxu0 0
    %2574 = vmatpush1.bf16.msra.mxu0 %v2454
    %2575 = vmatprep.subr.bf16.mxu0 0
    %2576 = vmatpush2.bf16.msra.mxu0 0
    %2577 = vmatprep.subr.bf16.mxu0 0
    %2578 = vmatpush2.bf16.msra.mxu0 0
    %2579 = vmatprep.subr.bf16.mxu0 0
    %2580 = vmatpush2.bf16.msra.mxu0 0
    %2581 = vmatprep.subr.bf16.mxu0 0
    %2582 = vmatpush2.bf16.msra.mxu0 0
    %2583 = vmatprep.subr.bf16.mxu0 0
    %2584 = vmatpush2.bf16.msra.mxu0 0
    %2585 = vmatprep.subr.bf16.mxu0 0
    %2586 = vmatpush2.bf16.msra.mxu0 0
    %2587 = vmatprep.subr.bf16.mxu0 0
    %2588 = vmatpush2.bf16.msra.mxu0 0
    %2589 = vmatprep.subr.bf16.mxu0 0
    %2590 = vmatpush2.bf16.msra.mxu0 0
    %2591 = vmatprep.mubr.bf16.mxu0 0
    %2592 = vmatmul.mubr.bf16.gmra.mxu0 %v2543
    %v2593 = vpop.f32.mrf.mxu0
    %v2594 = vadd.f32 %v2464, %v2593
    %v2595 = vpop.f32.mrf.mxu0
    %v2596 = vpop.f32.mrf.mxu0
    %v2597 = vpop.f32.mrf.mxu0
    %2598 = vmatprep.mubr.bf16.mxu0 0
    %2599 = vmatmul.mubr.bf16.gmra.mxu0 %v2544
    %v2600 = vpop.f32.mrf.mxu0
    %v2601 = vpop.f32.mrf.mxu0
    %v2602 = vpop.f32.mrf.mxu0
    %v2603 = vpop.f32.mrf.mxu0
    %2604 = vmatprep.mubr.bf16.mxu0 0
    %2605 = vmatmul.mubr.bf16.gmra.mxu0 %v2545
    %v2606 = vpop.f32.mrf.mxu0
    %v2607 = vpop.f32.mrf.mxu0
    %v2608 = vpop.f32.mrf.mxu0
    %v2609 = vpop.f32.mrf.mxu0
    %2610 = vmatprep.mubr.bf16.mxu0 0
    %2611 = vmatmul.mubr.bf16.gmra.mxu0 %v2546
    %v2612 = vpop.f32.mrf.mxu0
    %v2613 = vpop.f32.mrf.mxu0
    %v2614 = vpop.f32.mrf.mxu0
    %v2615 = vpop.f32.mrf.mxu0
    %2616 = vmatprep.mubr.bf16.mxu0 0
    %2617 = vmatmul.mubr.bf16.gmra.mxu0 %v2547
    %v2618 = vpop.f32.mrf.mxu0
    %v2619 = vpop.f32.mrf.mxu0
    %v2620 = vpop.f32.mrf.mxu0
    %v2621 = vpop.f32.mrf.mxu0
    %2622 = vmatprep.mubr.bf16.mxu0 0
    %2623 = vmatmul.mubr.bf16.gmra.mxu0 %v2548
    %v2624 = vpop.f32.mrf.mxu0
    %v2625 = vpop.f32.mrf.mxu0
    %v2626 = vpop.f32.mrf.mxu0
    %v2627 = vpop.f32.mrf.mxu0
    %2628 = vmatprep.mubr.bf16.mxu0 0
    %2629 = vmatmul.mubr.bf16.gmra.mxu0 %v2549
    %v2630 = vpop.f32.mrf.mxu0
    %v2631 = vpop.f32.mrf.mxu0
    %v2632 = vpop.f32.mrf.mxu0
    %v2633 = vpop.f32.mrf.mxu0
    %2634 = vmatprep.mubr.bf16.mxu0 0
    %2635 = vmatmul.mubr.bf16.gmra.mxu0 %v2550
    %v2636 = vpop.f32.mrf.mxu0
    %v2637 = vpop.f32.mrf.mxu0
    %v2638 = vpop.f32.mrf.mxu0
    %v2639 = vpop.f32.mrf.mxu0
    %2640 = vdwg.mxu0
    %2641 = vst [vmem:[#allocation5] sm:$0x7] %v2594
    // Predicated region
    $region22: #{_run_kernel.1} parent=1 // pred_check
      _
    $region23: #{_run_kernel.1} parent=1 // pred_check_branch
      %2643 = sbr.rel (0) target = $region25
    $region24: #{_run_kernel.1} parent=1 // pred_region
      %s2645 = ssub.s32 64, 64
      %2646 = vsyncadd [#allocation4], %s2645
      %s2648 = sshll.u32 [#allocation5], 4
      %s2649 = int_to_ptr.vmem [resolvable:$true] %s2648
      %2651 = dma.vmem_to_hbm [thread:$0]  %s2649, 64, %s4, [#allocation4]
    $region25: #{_run_kernel.1} parent=1 // pred_fallthru
      _
    // Predicated region
    $region26: #{_run_kernel.1} parent=1 // pred_check
      _
    $region27: #{_run_kernel.1} parent=1 // pred_check_branch
      %2653 = sbr.rel (0) target = $region29
    $region28: #{_run_kernel.1} parent=1 // pred_region
      %2654 = dma.done [#allocation4], 64
    $region29: #{_run_kernel.1} parent=1 // pred_fallthru
      _
    %2655 = vsyncpa [#allocation3], 1
    %2656 = vsyncpa [#allocation4], 1

</llo_original>
